<compile_context>
chip_gen: v7x
topology: tpu7x:2x2x1
jax: 0.10.0
libtpu: 0.0.40
codegen_flags: <defaults>
</compile_context>

<pallas_src>
import functools

import numpy as np
import jax
import jax.numpy as jnp
from jax import lax
from jax.experimental import pallas as pl
from jax.experimental.pallas import tpu as pltpu

# ---------------- module hyper-parameters (small test config) ----------------
INPUT_SIZE   = 16            # L (seq len == rows of w_gate)
NUM_NODES    = 4             # N
D_FEAT       = 2             # trailing feature dim of x
NUM_EXPERTS  = 6
TOP_K        = 4
KERNEL_SIZES = (4, 8, 12)    # series_decomp_multi moving-average kernels
FOURIER_K    = 3             # FourierLayer top-k frequencies
LOW_FREQ     = 1
LOSS_COEF    = 0.01

SEG         = 128                          # lane-tile width (alignment unit)
NK          = len(KERNEL_SIZES)
NFREQ       = INPUT_SIZE // 2 - LOW_FREQ   # rFFT bins kept (DC & Nyquist dropped)
COL_WGATE   = (NK + 2) * SEG               # w_gate column offset inside slab A
COL_GW      = (NK + 3) * SEG               # folded start_linear column offset
SLAB_A_COLS = (NK + 4) * SEG               # 7 * 128 = 896


# =============================================================================
# Fused kernel: decomposition + gating + balance loss + combine/residual
# =============================================================================
def _ams_kernel(x0_ref, xflat_ref, wa_ref, wb_ref, sc_ref, out_ref, loss_ref):
    BN, L = x0_ref.shape                   # BN = B * N, time on lanes
    B, _ = xflat_ref.shape
    E = NUM_EXPERTS
    F = NFREQ

    xb = x0_ref[...]                                            # [BN, L]

    # ---- one fused matmul: all moving averages + rFFT Re / Im ---------------
    # every segment is tile-aligned (its own 128-lane tile) => offset-0 slices
    big = jnp.dot(xb, wa_ref[:, :(NK + 2) * SEG],
                  preferred_element_type=jnp.float32)           # [BN,(NK+2)*128]

    # ---- trend: series_decomp_multi (per-element softmax mixture) -----------
    mas = [big[:, j * SEG:j * SEG + L] for j in range(NK)]      # nk x [BN, L]
    lg = [xb * sc_ref[j] + sc_ref[NK + j] for j in range(NK)]   # Linear(1, nk)
    m = lg[0]
    for j in range(1, NK):
        m = jnp.maximum(m, lg[j])
    es = [jnp.exp(v - m) for v in lg]
    den = es[0]
    num = es[0] * mas[0]
    for j in range(1, NK):
        den = den + es[j]
        num = num + es[j] * mas[j]
    trend = num / den                                           # [BN, L]

    # ---- seasonality: FourierLayer top-k freqs (rank-based selection) -------
    re_t = big[:, NK * SEG:(NK + 1) * SEG]                      # [BN,128], lanes 0..F-1 valid
    im_t = big[:, (NK + 1) * SEG:(NK + 2) * SEG]                # [BN,128]
    amp2 = re_t * re_t + im_t * im_t
    fidx = lax.broadcasted_iota(jnp.int32, (BN, SEG), 1)
    ampv = jnp.where(fidx < F, amp2, -1.0)                      # padded lanes never win
    rank = jnp.zeros((BN, SEG), jnp.float32)
    for j in range(F):                                          # independent chains
        cj = ampv[:, j:j + 1]                                   # [BN,1] lane broadcast
        beats = (cj > ampv) | ((cj == ampv) & (fidx > j))       # first-occurrence ties
        rank = rank + beats.astype(jnp.float32)
    fmask = ((rank < FOURIER_K) & (fidx < F)).astype(jnp.float32)
    # fused reconstruction: seas = [mask*Re | mask*Im] @ [(2/L)cos ; -(2/L)sin]
    masked = jnp.concatenate([fmask * re_t, fmask * im_t], axis=1)      # [BN, 256]
    seas = jnp.dot(masked, wb_ref[...], preferred_element_type=jnp.float32)  # [BN, L]

    new_x = xb + seas + trend                                   # [BN, L]

    # ---- gating: start_linear folded into Gw, logits via w_gate -------------
    gw = wa_ref[0:B, COL_GW:COL_GW + BN]                        # [B, BN]
    wg = wa_ref[:, COL_WGATE:COL_WGATE + E]                     # [L, E]
    xg = jnp.dot(gw, new_x, preferred_element_type=jnp.float32) + sc_ref[2 * NK]
    logits = jnp.dot(xg, wg, preferred_element_type=jnp.float32)        # [B, E]

    eidx = lax.broadcasted_iota(jnp.int32, (B, E), 1)
    rank2 = jnp.zeros((B, E), jnp.float32)
    for j in range(E):                                          # independent chains
        cj = logits[:, j:j + 1]
        beats = (cj > logits) | ((cj == logits) & (eidx > j))
        rank2 = rank2 + beats.astype(jnp.float32)
    sel = (rank2 < TOP_K).astype(jnp.float32)                   # exactly TOP_K per row

    # softmax over the selected top-k logits, scattered back into [B, E]
    masked_lg = jnp.where(sel > 0, logits, -jnp.inf)
    rowmax = jnp.max(masked_lg, axis=1, keepdims=True)
    numer = jnp.where(sel > 0, jnp.exp(logits - rowmax), 0.0)
    gates = numer / jnp.sum(numer, axis=1, keepdims=True)       # [B, E]

    importance = jnp.sum(gates, axis=0, keepdims=True)          # [1, E]
    load = jnp.sum((gates > 0).astype(jnp.float32), axis=0, keepdims=True)

    def cv_sq(v):                                               # v: [1, E]
        mean = jnp.sum(v, axis=1, keepdims=True) / E
        var = jnp.sum((v - mean) ** 2, axis=1, keepdims=True) / (E - 1)
        return var / (mean * mean + 1e-10)

    loss_ref[...] = (cv_sq(importance) + cv_sq(load)) * LOSS_COEF

    # ---- SparseDispatcher.combine (identity experts) + residual -------------
    # combine = sum_e gates[b,e] * expert_out_e(x)[b]; identity experts =>
    # out = x * (1 + rowsum(gates))
    gsum = jnp.sum(gates, axis=1, keepdims=True)                # [B, 1]
    out_ref[...] = xflat_ref[...] * (1.0 + gsum)                # [B, L*N*D]


def ams_fused(x0, x_flat, slab_a, slab_b, scalars):
    BN, L = x0.shape
    B, Fm = x_flat.shape
    smem = pltpu.MemorySpace.SMEM
    # NOTE(v7x): grid=(1,) keeps this KB-scale problem on one TensorCore; for a
    # real workload (bigger batch / stacked layers / time windows) add a leading
    # "parallel" grid axis and finish the cv^2 loss from per-shard partials.
    return pl.pallas_call(
        _ams_kernel,
        out_shape=(jax.ShapeDtypeStruct((B, Fm), jnp.float32),
                   jax.ShapeDtypeStruct((1, 1), jnp.float32)),
        grid_spec=pltpu.PrefetchScalarGridSpec(
            num_scalar_prefetch=0,
            grid=(1,),
            in_specs=[
                pl.BlockSpec((BN, L), lambda i: (0, 0)),
                pl.BlockSpec((B, Fm), lambda i: (0, 0)),
                pl.BlockSpec(slab_a.shape, lambda i: (0, 0)),
                pl.BlockSpec(slab_b.shape, lambda i: (0, 0)),
                pl.BlockSpec(scalars.shape, lambda i: (0,), memory_space=smem),
            ],
            out_specs=[
                pl.BlockSpec((B, Fm), lambda i: (0, 0)),
                pl.BlockSpec((1, 1), lambda i: (0, 0)),
            ],
        ),
        input_output_aliases={1: 0},            # out = x_flat * (1 + gsum)
        compiler_params=pltpu.CompilerParams(
            dimension_semantics=("arbitrary",)),
    )(x0, x_flat, slab_a, slab_b, scalars)


# =============================================================================
# Host-side constant construction (glue)
# =============================================================================
def build_fixed(L=INPUT_SIZE, kernel_sizes=KERNEL_SIZES, low_freq=LOW_FREQ):
    nk = len(kernel_sizes)
    F = L // 2 - low_freq
    # slab A: [L, 7*128] -- MA_0 | MA_1 | MA_2 | Re | Im | (w_gate) | (Gw)
    slab_a = np.zeros((L, SLAB_A_COLS), np.float32)
    # moving_avg: replicate-pad front=(k-1)//2, end=k//2, AvgPool1d(k, stride=1)
    for j, k in enumerate(kernel_sizes):
        front = (k - 1) // 2
        A = np.zeros((L, L), np.float32)
        for t in range(L):
            for q in range(k):
                i = min(max(t - front + q, 0), L - 1)
                A[t, i] += 1.0 / k
        slab_a[:, j * SEG:j * SEG + L] = A.T                 # x @ A.T = moving avg
    # rFFT bins x_freq[:, low_freq:-1] (DC and Nyquist dropped)
    freqs = np.arange(low_freq, low_freq + F)
    tt = np.arange(L)
    ang = 2.0 * np.pi * np.outer(freqs, tt) / L              # [F, L]
    cosM = np.cos(ang).astype(np.float32)
    sinM = np.sin(ang).astype(np.float32)
    slab_a[:, nk * SEG:nk * SEG + F] = cosM.T                # Re =  x @ cos^T
    slab_a[:, (nk + 1) * SEG:(nk + 1) * SEG + F] = -sinM.T   # Im = -x @ sin^T
    # slab B: fused reconstruction, seas = [Re|Im] @ [(2/L)cos ; -(2/L)sin]
    slab_b = np.zeros((2 * SEG, L), np.float32)
    slab_b[:F, :] = (2.0 / L) * cosM
    slab_b[SEG:SEG + F, :] = -(2.0 / L) * sinM
    return jnp.asarray(slab_a), jnp.asarray(slab_b)


def init_params(key, L, N, E, kernel_sizes):
    k1, k2, k3, k4, k5 = jax.random.split(key, 5)
    nk = len(kernel_sizes)
    return {
        # series_decomp_multi Linear(1, nk)
        "w_dec": 0.1 * jax.random.normal(k1, (nk,), jnp.float32),
        "b_dec": 0.1 * jax.random.normal(k2, (nk,), jnp.float32),
        # start_linear: Linear(num_nodes, 1)
        "start_w": 0.1 * jax.random.normal(k3, (N,), jnp.float32),
        "start_b": 0.1 * jax.random.normal(k4, (1,), jnp.float32),
        # gating weights (module inits zeros; small random for non-degenerate top-k)
        "w_gate": 0.1 * jax.random.normal(k5, (L, E), jnp.float32),
        "w_noise": jnp.zeros((L, E), jnp.float32),   # unused (eval path)
    }


# =============================================================================
# Full AMS forward (eval mode)
# =============================================================================
def ams_forward(x, params, slab_a_fixed, slab_b, loss_coef=LOSS_COEF):
    B, L, N, D = x.shape
    assert B <= L and FOURIER_K <= NFREQ and TOP_K <= NUM_EXPERTS
    # layout plumbing (host side): (batch*node) on sublanes, time on lanes
    x0 = jnp.transpose(x[..., 0], (0, 2, 1)).reshape(B * N, L)     # [B*N, L]
    x_flat = x.reshape(B, L * N * D)                               # lane-dense [B,128]
    # fold trainable gating params into the constant slab (tiny XLA updates)
    gw = (jnp.eye(B, dtype=jnp.float32)[:, :, None]
          * params["start_w"].reshape(1, 1, N)).reshape(B, B * N)  # start_linear fold
    slab_a = slab_a_fixed.at[:, COL_WGATE:COL_WGATE + NUM_EXPERTS].set(params["w_gate"])
    slab_a = slab_a.at[:B, COL_GW:COL_GW + B * N].set(gw)
    scalars = jnp.concatenate([params["w_dec"], params["b_dec"], params["start_b"],
                               jnp.zeros((1,), jnp.float32)])      # one SMEM vector

    # TODO(synk): Transformer_Layer experts (layers/Layer.py) were not provided
    # in the source; identity experts are used so the SparseDispatcher
    # dispatch/combine arithmetic (gate-weighted sum over experts) stays exact.
    out_flat, loss = ams_fused(x0, x_flat, slab_a, slab_b, scalars)
    return out_flat.reshape(B, L, N, D), loss[0, 0]


if __name__ == "__main__":
    key = jax.random.PRNGKey(0)
    kx, kp = jax.random.split(key)

    B = 8
    x = jax.random.normal(kx, (B, INPUT_SIZE, NUM_NODES, D_FEAT), jnp.float32)
    params = init_params(kp, INPUT_SIZE, NUM_NODES, NUM_EXPERTS, KERNEL_SIZES)
    slab_a_fixed, slab_b = build_fixed()

    fwd = jax.jit(functools.partial(ams_forward, params=params,
                                    slab_a_fixed=slab_a_fixed, slab_b=slab_b))
    out, balance_loss = fwd(x)
    jax.block_until_ready(out)
    jax.block_until_ready(balance_loss)

    assert out.shape == x.shape and out.dtype == jnp.float32
    assert balance_loss.shape == ()
    print("KERNEL_OK")
</pallas_src>

<mosaic_0001>
module attributes {stable_mosaic.version = 11 : i64} {
  func.func @_ams_kernel(%arg0: i32, %arg1: memref<32x16xf32, #tpu.memory_space<vmem>>, %arg2: memref<8x128xf32, #tpu.memory_space<vmem>>, %arg3: memref<16x896xf32, #tpu.memory_space<vmem>>, %arg4: memref<256x16xf32, #tpu.memory_space<vmem>>, %arg5: memref<8xf32, #tpu.memory_space<smem>>, %arg6: memref<8x128xf32, #tpu.memory_space<vmem>>, %arg7: memref<1x1xf32, #tpu.memory_space<vmem>>) attributes {dimension_semantics = [#tpu.dimension_semantics<arbitrary>], iteration_bounds = array<i64: 1>, scalar_prefetch = 0 : i64, scratch_operands = 0 : i64, tpu.core_type = #tpu.core_type<tc>, window_params = [{pipeline_mode = #tpu.pipeline_mode<synchronous>, transform_indices = @transform_0, window_bounds = array<i64: 32, 16>}, {pipeline_mode = #tpu.pipeline_mode<synchronous>, transform_indices = @transform_1, window_bounds = array<i64: 8, 128>}, {pipeline_mode = #tpu.pipeline_mode<synchronous>, transform_indices = @transform_2, window_bounds = array<i64: 16, 896>}, {pipeline_mode = #tpu.pipeline_mode<synchronous>, transform_indices = @transform_3, window_bounds = array<i64: 256, 16>}, {transform_indices = @transform_4, window_bounds = array<i64: 8>}, {pipeline_mode = #tpu.pipeline_mode<synchronous>, transform_indices = @transform_5, window_bounds = array<i64: 8, 128>}, {pipeline_mode = #tpu.pipeline_mode<synchronous>, transform_indices = @transform_6, window_bounds = array<i64: 1, 1>}]} {
    %c0 = arith.constant 0 : index
    %c0_0 = arith.constant 0 : index
    %0 = vector.load %arg1[%c0, %c0_0] : memref<32x16xf32, #tpu.memory_space<vmem>>, vector<32x16xf32>
    %c0_1 = arith.constant 0 : index
    %c0_2 = arith.constant 0 : index
    %1 = vector.load %arg3[%c0_1, %c0_2] : memref<16x896xf32, #tpu.memory_space<vmem>>, vector<16x640xf32>
    %cst = arith.constant dense<0.000000e+00> : vector<32x640xf32>
    %2 = tpu.matmul %0, %1, %cst {dimension_numbers = #tpu.dot_dimension_numbers<[1], [0], [0], [1], [0, 0, 1, 1], [], []>} : vector<32x16xf32>, vector<16x640xf32>, vector<32x640xf32> -> vector<32x640xf32>
    %3 = vector.extract_strided_slice %2 {offsets = [0, 0], sizes = [32, 16], strides = [1, 1]} : vector<32x640xf32> to vector<32x16xf32>
    %4 = vector.extract_strided_slice %2 {offsets = [0, 128], sizes = [32, 16], strides = [1, 1]} : vector<32x640xf32> to vector<32x16xf32>
    %5 = vector.extract_strided_slice %2 {offsets = [0, 256], sizes = [32, 16], strides = [1, 1]} : vector<32x640xf32> to vector<32x16xf32>
    %c0_3 = arith.constant 0 : index
    %6 = memref.load %arg5[%c0_3] : memref<8xf32, #tpu.memory_space<smem>>
    %7 = vector.broadcast %6 : f32 to vector<32x16xf32>
    %8 = arith.mulf %0, %7 : vector<32x16xf32>
    %c3 = arith.constant 3 : index
    %9 = memref.load %arg5[%c3] : memref<8xf32, #tpu.memory_space<smem>>
    %10 = vector.broadcast %9 : f32 to vector<32x16xf32>
    %11 = arith.addf %8, %10 : vector<32x16xf32>
    %c1 = arith.constant 1 : index
    %12 = memref.load %arg5[%c1] : memref<8xf32, #tpu.memory_space<smem>>
    %13 = vector.broadcast %12 : f32 to vector<32x16xf32>
    %14 = arith.mulf %0, %13 : vector<32x16xf32>
    %c4 = arith.constant 4 : index
    %15 = memref.load %arg5[%c4] : memref<8xf32, #tpu.memory_space<smem>>
    %16 = vector.broadcast %15 : f32 to vector<32x16xf32>
    %17 = arith.addf %14, %16 : vector<32x16xf32>
    %c2 = arith.constant 2 : index
    %18 = memref.load %arg5[%c2] : memref<8xf32, #tpu.memory_space<smem>>
    %19 = vector.broadcast %18 : f32 to vector<32x16xf32>
    %20 = arith.mulf %0, %19 : vector<32x16xf32>
    %c5 = arith.constant 5 : index
    %21 = memref.load %arg5[%c5] : memref<8xf32, #tpu.memory_space<smem>>
    %22 = vector.broadcast %21 : f32 to vector<32x16xf32>
    %23 = arith.addf %20, %22 : vector<32x16xf32>
    %24 = arith.maximumf %11, %17 : vector<32x16xf32>
    %25 = arith.maximumf %24, %23 : vector<32x16xf32>
    %26 = arith.subf %11, %25 : vector<32x16xf32>
    %27 = math.exp %26 : vector<32x16xf32>
    %28 = arith.subf %17, %25 : vector<32x16xf32>
    %29 = math.exp %28 : vector<32x16xf32>
    %30 = arith.subf %23, %25 : vector<32x16xf32>
    %31 = math.exp %30 : vector<32x16xf32>
    %32 = arith.mulf %27, %3 : vector<32x16xf32>
    %33 = arith.addf %27, %29 : vector<32x16xf32>
    %34 = arith.mulf %29, %4 : vector<32x16xf32>
    %35 = arith.addf %32, %34 : vector<32x16xf32>
    %36 = arith.addf %33, %31 : vector<32x16xf32>
    %37 = arith.mulf %31, %5 : vector<32x16xf32>
    %38 = arith.addf %35, %37 : vector<32x16xf32>
    %39 = arith.divf %38, %36 : vector<32x16xf32>
    %40 = vector.extract_strided_slice %2 {offsets = [0, 384], sizes = [32, 128], strides = [1, 1]} : vector<32x640xf32> to vector<32x128xf32>
    %41 = vector.extract_strided_slice %2 {offsets = [0, 512], sizes = [32, 128], strides = [1, 1]} : vector<32x640xf32> to vector<32x128xf32>
    %42 = arith.mulf %40, %40 : vector<32x128xf32>
    %43 = arith.mulf %41, %41 : vector<32x128xf32>
    %44 = arith.addf %42, %43 : vector<32x128xf32>
    %45 = tpu.iota {dimensions = array<i32: 1>} : vector<32x128xi32>
    %c7_i32 = arith.constant 7 : i32
    %46 = vector.broadcast %c7_i32 : i32 to vector<32x128xi32>
    %47 = arith.cmpi slt, %45, %46 : vector<32x128xi32>
    %cst_4 = arith.constant -1.000000e+00 : f32
    %48 = vector.broadcast %cst_4 : f32 to vector<32x128xf32>
    %49 = arith.select %47, %44, %48 : vector<32x128xi1>, vector<32x128xf32>
    %cst_5 = arith.constant 0.000000e+00 : f32
    %50 = vector.broadcast %cst_5 : f32 to vector<32x128xf32>
    %51 = vector.extract_strided_slice %49 {offsets = [0, 0], sizes = [32, 1], strides = [1, 1]} : vector<32x128xf32> to vector<32x1xf32>
    %52 = vector.broadcast %51 : vector<32x1xf32> to vector<32x128xf32>
    %53 = arith.cmpf ogt, %52, %49 : vector<32x128xf32>
    %54 = vector.broadcast %51 : vector<32x1xf32> to vector<32x128xf32>
    %55 = arith.cmpf oeq, %54, %49 : vector<32x128xf32>
    %c0_i32 = arith.constant 0 : i32
    %56 = vector.broadcast %c0_i32 : i32 to vector<32x128xi32>
    %57 = arith.cmpi sgt, %45, %56 : vector<32x128xi32>
    %58 = arith.andi %55, %57 : vector<32x128xi1>
    %59 = arith.ori %53, %58 : vector<32x128xi1>
    %60 = arith.extui %59 : vector<32x128xi1> to vector<32x128xi32>
    %61 = arith.sitofp %60 : vector<32x128xi32> to vector<32x128xf32>
    %62 = arith.addf %50, %61 : vector<32x128xf32>
    %63 = vector.extract_strided_slice %49 {offsets = [0, 1], sizes = [32, 1], strides = [1, 1]} : vector<32x128xf32> to vector<32x1xf32>
    %64 = vector.broadcast %63 : vector<32x1xf32> to vector<32x128xf32>
    %65 = arith.cmpf ogt, %64, %49 : vector<32x128xf32>
    %66 = vector.broadcast %63 : vector<32x1xf32> to vector<32x128xf32>
    %67 = arith.cmpf oeq, %66, %49 : vector<32x128xf32>
    %c1_i32 = arith.constant 1 : i32
    %68 = vector.broadcast %c1_i32 : i32 to vector<32x128xi32>
    %69 = arith.cmpi sgt, %45, %68 : vector<32x128xi32>
    %70 = arith.andi %67, %69 : vector<32x128xi1>
    %71 = arith.ori %65, %70 : vector<32x128xi1>
    %72 = arith.extui %71 : vector<32x128xi1> to vector<32x128xi32>
    %73 = arith.sitofp %72 : vector<32x128xi32> to vector<32x128xf32>
    %74 = arith.addf %62, %73 : vector<32x128xf32>
    %75 = vector.extract_strided_slice %49 {offsets = [0, 2], sizes = [32, 1], strides = [1, 1]} : vector<32x128xf32> to vector<32x1xf32>
    %76 = vector.broadcast %75 : vector<32x1xf32> to vector<32x128xf32>
    %77 = arith.cmpf ogt, %76, %49 : vector<32x128xf32>
    %78 = vector.broadcast %75 : vector<32x1xf32> to vector<32x128xf32>
    %79 = arith.cmpf oeq, %78, %49 : vector<32x128xf32>
    %c2_i32 = arith.constant 2 : i32
    %80 = vector.broadcast %c2_i32 : i32 to vector<32x128xi32>
    %81 = arith.cmpi sgt, %45, %80 : vector<32x128xi32>
    %82 = arith.andi %79, %81 : vector<32x128xi1>
    %83 = arith.ori %77, %82 : vector<32x128xi1>
    %84 = arith.extui %83 : vector<32x128xi1> to vector<32x128xi32>
    %85 = arith.sitofp %84 : vector<32x128xi32> to vector<32x128xf32>
    %86 = arith.addf %74, %85 : vector<32x128xf32>
    %87 = vector.extract_strided_slice %49 {offsets = [0, 3], sizes = [32, 1], strides = [1, 1]} : vector<32x128xf32> to vector<32x1xf32>
    %88 = vector.broadcast %87 : vector<32x1xf32> to vector<32x128xf32>
    %89 = arith.cmpf ogt, %88, %49 : vector<32x128xf32>
    %90 = vector.broadcast %87 : vector<32x1xf32> to vector<32x128xf32>
    %91 = arith.cmpf oeq, %90, %49 : vector<32x128xf32>
    %c3_i32 = arith.constant 3 : i32
    %92 = vector.broadcast %c3_i32 : i32 to vector<32x128xi32>
    %93 = arith.cmpi sgt, %45, %92 : vector<32x128xi32>
    %94 = arith.andi %91, %93 : vector<32x128xi1>
    %95 = arith.ori %89, %94 : vector<32x128xi1>
    %96 = arith.extui %95 : vector<32x128xi1> to vector<32x128xi32>
    %97 = arith.sitofp %96 : vector<32x128xi32> to vector<32x128xf32>
    %98 = arith.addf %86, %97 : vector<32x128xf32>
    %99 = vector.extract_strided_slice %49 {offsets = [0, 4], sizes = [32, 1], strides = [1, 1]} : vector<32x128xf32> to vector<32x1xf32>
    %100 = vector.broadcast %99 : vector<32x1xf32> to vector<32x128xf32>
    %101 = arith.cmpf ogt, %100, %49 : vector<32x128xf32>
    %102 = vector.broadcast %99 : vector<32x1xf32> to vector<32x128xf32>
    %103 = arith.cmpf oeq, %102, %49 : vector<32x128xf32>
    %c4_i32 = arith.constant 4 : i32
    %104 = vector.broadcast %c4_i32 : i32 to vector<32x128xi32>
    %105 = arith.cmpi sgt, %45, %104 : vector<32x128xi32>
    %106 = arith.andi %103, %105 : vector<32x128xi1>
    %107 = arith.ori %101, %106 : vector<32x128xi1>
    %108 = arith.extui %107 : vector<32x128xi1> to vector<32x128xi32>
    %109 = arith.sitofp %108 : vector<32x128xi32> to vector<32x128xf32>
    %110 = arith.addf %98, %109 : vector<32x128xf32>
    %111 = vector.extract_strided_slice %49 {offsets = [0, 5], sizes = [32, 1], strides = [1, 1]} : vector<32x128xf32> to vector<32x1xf32>
    %112 = vector.broadcast %111 : vector<32x1xf32> to vector<32x128xf32>
    %113 = arith.cmpf ogt, %112, %49 : vector<32x128xf32>
    %114 = vector.broadcast %111 : vector<32x1xf32> to vector<32x128xf32>
    %115 = arith.cmpf oeq, %114, %49 : vector<32x128xf32>
    %c5_i32 = arith.constant 5 : i32
    %116 = vector.broadcast %c5_i32 : i32 to vector<32x128xi32>
    %117 = arith.cmpi sgt, %45, %116 : vector<32x128xi32>
    %118 = arith.andi %115, %117 : vector<32x128xi1>
    %119 = arith.ori %113, %118 : vector<32x128xi1>
    %120 = arith.extui %119 : vector<32x128xi1> to vector<32x128xi32>
    %121 = arith.sitofp %120 : vector<32x128xi32> to vector<32x128xf32>
    %122 = arith.addf %110, %121 : vector<32x128xf32>
    %123 = vector.extract_strided_slice %49 {offsets = [0, 6], sizes = [32, 1], strides = [1, 1]} : vector<32x128xf32> to vector<32x1xf32>
    %124 = vector.broadcast %123 : vector<32x1xf32> to vector<32x128xf32>
    %125 = arith.cmpf ogt, %124, %49 : vector<32x128xf32>
    %126 = vector.broadcast %123 : vector<32x1xf32> to vector<32x128xf32>
    %127 = arith.cmpf oeq, %126, %49 : vector<32x128xf32>
    %c6_i32 = arith.constant 6 : i32
    %128 = vector.broadcast %c6_i32 : i32 to vector<32x128xi32>
    %129 = arith.cmpi sgt, %45, %128 : vector<32x128xi32>
    %130 = arith.andi %127, %129 : vector<32x128xi1>
    %131 = arith.ori %125, %130 : vector<32x128xi1>
    %132 = arith.extui %131 : vector<32x128xi1> to vector<32x128xi32>
    %133 = arith.sitofp %132 : vector<32x128xi32> to vector<32x128xf32>
    %134 = arith.addf %122, %133 : vector<32x128xf32>
    %cst_6 = arith.constant 3.000000e+00 : f32
    %135 = vector.broadcast %cst_6 : f32 to vector<32x128xf32>
    %136 = arith.cmpf olt, %134, %135 : vector<32x128xf32>
    %c7_i32_7 = arith.constant 7 : i32
    %137 = vector.broadcast %c7_i32_7 : i32 to vector<32x128xi32>
    %138 = arith.cmpi slt, %45, %137 : vector<32x128xi32>
    %139 = arith.andi %136, %138 : vector<32x128xi1>
    %140 = arith.extui %139 : vector<32x128xi1> to vector<32x128xi32>
    %141 = arith.sitofp %140 : vector<32x128xi32> to vector<32x128xf32>
    %142 = arith.mulf %141, %40 : vector<32x128xf32>
    %143 = arith.mulf %141, %41 : vector<32x128xf32>
    %144 = tpu.concatenate %142, %143 in 1 : vector<32x128xf32>, vector<32x128xf32> -> vector<32x256xf32>
    %c0_8 = arith.constant 0 : index
    %c0_9 = arith.constant 0 : index
    %145 = vector.load %arg4[%c0_8, %c0_9] : memref<256x16xf32, #tpu.memory_space<vmem>>, vector<256x16xf32>
    %cst_10 = arith.constant dense<0.000000e+00> : vector<32x16xf32>
    %146 = tpu.matmul %144, %145, %cst_10 {dimension_numbers = #tpu.dot_dimension_numbers<[1], [0], [0], [1], [0, 0, 1, 1], [], []>} : vector<32x256xf32>, vector<256x16xf32>, vector<32x16xf32> -> vector<32x16xf32>
    %147 = arith.addf %0, %146 : vector<32x16xf32>
    %148 = arith.addf %147, %39 : vector<32x16xf32>
    %c0_11 = arith.constant 0 : index
    %c768 = arith.constant 768 : index
    %149 = vector.load %arg3[%c0_11, %c768] : memref<16x896xf32, #tpu.memory_space<vmem>>, vector<8x32xf32>
    %c0_12 = arith.constant 0 : index
    %c640 = arith.constant 640 : index
    %150 = vector.load %arg3[%c0_12, %c640] : memref<16x896xf32, #tpu.memory_space<vmem>>, vector<16x6xf32>
    %cst_13 = arith.constant dense<0.000000e+00> : vector<8x16xf32>
    %151 = tpu.matmul %149, %148, %cst_13 {dimension_numbers = #tpu.dot_dimension_numbers<[1], [0], [0], [1], [0, 0, 1, 1], [], []>} : vector<8x32xf32>, vector<32x16xf32>, vector<8x16xf32> -> vector<8x16xf32>
    %c6 = arith.constant 6 : index
    %152 = memref.load %arg5[%c6] : memref<8xf32, #tpu.memory_space<smem>>
    %153 = vector.broadcast %152 : f32 to vector<8x16xf32>
    %154 = arith.addf %151, %153 : vector<8x16xf32>
    %cst_14 = arith.constant dense<0.000000e+00> : vector<8x6xf32>
    %155 = tpu.matmul %154, %150, %cst_14 {dimension_numbers = #tpu.dot_dimension_numbers<[1], [0], [0], [1], [0, 0, 1, 1], [], []>} : vector<8x16xf32>, vector<16x6xf32>, vector<8x6xf32> -> vector<8x6xf32>
    %156 = tpu.iota {dimensions = array<i32: 1>} : vector<8x6xi32>
    %cst_15 = arith.constant 0.000000e+00 : f32
    %157 = vector.broadcast %cst_15 : f32 to vector<8x6xf32>
    %158 = vector.extract_strided_slice %155 {offsets = [0, 0], sizes = [8, 1], strides = [1, 1]} : vector<8x6xf32> to vector<8x1xf32>
    %159 = vector.broadcast %158 : vector<8x1xf32> to vector<8x6xf32>
    %160 = arith.cmpf ogt, %159, %155 : vector<8x6xf32>
    %161 = vector.broadcast %158 : vector<8x1xf32> to vector<8x6xf32>
    %162 = arith.cmpf oeq, %161, %155 : vector<8x6xf32>
    %c0_i32_16 = arith.constant 0 : i32
    %163 = vector.broadcast %c0_i32_16 : i32 to vector<8x6xi32>
    %164 = arith.cmpi sgt, %156, %163 : vector<8x6xi32>
    %165 = arith.andi %162, %164 : vector<8x6xi1>
    %166 = arith.ori %160, %165 : vector<8x6xi1>
    %167 = arith.extui %166 : vector<8x6xi1> to vector<8x6xi32>
    %168 = arith.sitofp %167 : vector<8x6xi32> to vector<8x6xf32>
    %169 = arith.addf %157, %168 : vector<8x6xf32>
    %170 = vector.extract_strided_slice %155 {offsets = [0, 1], sizes = [8, 1], strides = [1, 1]} : vector<8x6xf32> to vector<8x1xf32>
    %171 = vector.broadcast %170 : vector<8x1xf32> to vector<8x6xf32>
    %172 = arith.cmpf ogt, %171, %155 : vector<8x6xf32>
    %173 = vector.broadcast %170 : vector<8x1xf32> to vector<8x6xf32>
    %174 = arith.cmpf oeq, %173, %155 : vector<8x6xf32>
    %c1_i32_17 = arith.constant 1 : i32
    %175 = vector.broadcast %c1_i32_17 : i32 to vector<8x6xi32>
    %176 = arith.cmpi sgt, %156, %175 : vector<8x6xi32>
    %177 = arith.andi %174, %176 : vector<8x6xi1>
    %178 = arith.ori %172, %177 : vector<8x6xi1>
    %179 = arith.extui %178 : vector<8x6xi1> to vector<8x6xi32>
    %180 = arith.sitofp %179 : vector<8x6xi32> to vector<8x6xf32>
    %181 = arith.addf %169, %180 : vector<8x6xf32>
    %182 = vector.extract_strided_slice %155 {offsets = [0, 2], sizes = [8, 1], strides = [1, 1]} : vector<8x6xf32> to vector<8x1xf32>
    %183 = vector.broadcast %182 : vector<8x1xf32> to vector<8x6xf32>
    %184 = arith.cmpf ogt, %183, %155 : vector<8x6xf32>
    %185 = vector.broadcast %182 : vector<8x1xf32> to vector<8x6xf32>
    %186 = arith.cmpf oeq, %185, %155 : vector<8x6xf32>
    %c2_i32_18 = arith.constant 2 : i32
    %187 = vector.broadcast %c2_i32_18 : i32 to vector<8x6xi32>
    %188 = arith.cmpi sgt, %156, %187 : vector<8x6xi32>
    %189 = arith.andi %186, %188 : vector<8x6xi1>
    %190 = arith.ori %184, %189 : vector<8x6xi1>
    %191 = arith.extui %190 : vector<8x6xi1> to vector<8x6xi32>
    %192 = arith.sitofp %191 : vector<8x6xi32> to vector<8x6xf32>
    %193 = arith.addf %181, %192 : vector<8x6xf32>
    %194 = vector.extract_strided_slice %155 {offsets = [0, 3], sizes = [8, 1], strides = [1, 1]} : vector<8x6xf32> to vector<8x1xf32>
    %195 = vector.broadcast %194 : vector<8x1xf32> to vector<8x6xf32>
    %196 = arith.cmpf ogt, %195, %155 : vector<8x6xf32>
    %197 = vector.broadcast %194 : vector<8x1xf32> to vector<8x6xf32>
    %198 = arith.cmpf oeq, %197, %155 : vector<8x6xf32>
    %c3_i32_19 = arith.constant 3 : i32
    %199 = vector.broadcast %c3_i32_19 : i32 to vector<8x6xi32>
    %200 = arith.cmpi sgt, %156, %199 : vector<8x6xi32>
    %201 = arith.andi %198, %200 : vector<8x6xi1>
    %202 = arith.ori %196, %201 : vector<8x6xi1>
    %203 = arith.extui %202 : vector<8x6xi1> to vector<8x6xi32>
    %204 = arith.sitofp %203 : vector<8x6xi32> to vector<8x6xf32>
    %205 = arith.addf %193, %204 : vector<8x6xf32>
    %206 = vector.extract_strided_slice %155 {offsets = [0, 4], sizes = [8, 1], strides = [1, 1]} : vector<8x6xf32> to vector<8x1xf32>
    %207 = vector.broadcast %206 : vector<8x1xf32> to vector<8x6xf32>
    %208 = arith.cmpf ogt, %207, %155 : vector<8x6xf32>
    %209 = vector.broadcast %206 : vector<8x1xf32> to vector<8x6xf32>
    %210 = arith.cmpf oeq, %209, %155 : vector<8x6xf32>
    %c4_i32_20 = arith.constant 4 : i32
    %211 = vector.broadcast %c4_i32_20 : i32 to vector<8x6xi32>
    %212 = arith.cmpi sgt, %156, %211 : vector<8x6xi32>
    %213 = arith.andi %210, %212 : vector<8x6xi1>
    %214 = arith.ori %208, %213 : vector<8x6xi1>
    %215 = arith.extui %214 : vector<8x6xi1> to vector<8x6xi32>
    %216 = arith.sitofp %215 : vector<8x6xi32> to vector<8x6xf32>
    %217 = arith.addf %205, %216 : vector<8x6xf32>
    %218 = vector.extract_strided_slice %155 {offsets = [0, 5], sizes = [8, 1], strides = [1, 1]} : vector<8x6xf32> to vector<8x1xf32>
    %219 = vector.broadcast %218 : vector<8x1xf32> to vector<8x6xf32>
    %220 = arith.cmpf ogt, %219, %155 : vector<8x6xf32>
    %221 = vector.broadcast %218 : vector<8x1xf32> to vector<8x6xf32>
    %222 = arith.cmpf oeq, %221, %155 : vector<8x6xf32>
    %c5_i32_21 = arith.constant 5 : i32
    %223 = vector.broadcast %c5_i32_21 : i32 to vector<8x6xi32>
    %224 = arith.cmpi sgt, %156, %223 : vector<8x6xi32>
    %225 = arith.andi %222, %224 : vector<8x6xi1>
    %226 = arith.ori %220, %225 : vector<8x6xi1>
    %227 = arith.extui %226 : vector<8x6xi1> to vector<8x6xi32>
    %228 = arith.sitofp %227 : vector<8x6xi32> to vector<8x6xf32>
    %229 = arith.addf %217, %228 : vector<8x6xf32>
    %cst_22 = arith.constant 4.000000e+00 : f32
    %230 = vector.broadcast %cst_22 : f32 to vector<8x6xf32>
    %231 = arith.cmpf olt, %229, %230 : vector<8x6xf32>
    %232 = arith.extui %231 : vector<8x6xi1> to vector<8x6xi32>
    %233 = arith.sitofp %232 : vector<8x6xi32> to vector<8x6xf32>
    %cst_23 = arith.constant 0.000000e+00 : f32
    %234 = vector.broadcast %cst_23 : f32 to vector<8x6xf32>
    %235 = arith.cmpf ogt, %233, %234 : vector<8x6xf32>
    %cst_24 = arith.constant 0xFF800000 : f32
    %236 = vector.broadcast %cst_24 : f32 to vector<8x6xf32>
    %237 = arith.select %235, %155, %236 : vector<8x6xi1>, vector<8x6xf32>
    %cst_25 = arith.constant dense<0xFF800000> : vector<8xf32>
    %238 = vector.multi_reduction <maximumf>, %237, %cst_25 [1] : vector<8x6xf32> to vector<8xf32>
    %239 = vector.shape_cast %238 : vector<8xf32> to vector<8x1xf32>
    %cst_26 = arith.constant 0.000000e+00 : f32
    %240 = vector.broadcast %cst_26 : f32 to vector<8x6xf32>
    %241 = arith.cmpf ogt, %233, %240 : vector<8x6xf32>
    %242 = vector.broadcast %239 : vector<8x1xf32> to vector<8x6xf32>
    %243 = arith.subf %155, %242 : vector<8x6xf32>
    %244 = math.exp %243 : vector<8x6xf32>
    %cst_27 = arith.constant 0.000000e+00 : f32
    %245 = vector.broadcast %cst_27 : f32 to vector<8x6xf32>
    %246 = arith.select %241, %244, %245 : vector<8x6xi1>, vector<8x6xf32>
    %cst_28 = arith.constant dense<0.000000e+00> : vector<8xf32>
    %247 = vector.multi_reduction <add>, %246, %cst_28 [1] : vector<8x6xf32> to vector<8xf32>
    %248 = vector.shape_cast %247 : vector<8xf32> to vector<8x1xf32>
    %249 = vector.broadcast %248 : vector<8x1xf32> to vector<8x6xf32>
    %250 = arith.divf %246, %249 : vector<8x6xf32>
    %cst_29 = arith.constant dense<0.000000e+00> : vector<6xf32>
    %251 = vector.multi_reduction <add>, %250, %cst_29 [0] : vector<8x6xf32> to vector<6xf32>
    %252 = vector.shape_cast %251 : vector<6xf32> to vector<1x6xf32>
    %cst_30 = arith.constant 0.000000e+00 : f32
    %253 = vector.broadcast %cst_30 : f32 to vector<8x6xf32>
    %254 = arith.cmpf ogt, %250, %253 : vector<8x6xf32>
    %255 = arith.extui %254 : vector<8x6xi1> to vector<8x6xi32>
    %256 = arith.sitofp %255 : vector<8x6xi32> to vector<8x6xf32>
    %cst_31 = arith.constant dense<0.000000e+00> : vector<6xf32>
    %257 = vector.multi_reduction <add>, %256, %cst_31 [0] : vector<8x6xf32> to vector<6xf32>
    %258 = vector.shape_cast %257 : vector<6xf32> to vector<1x6xf32>
    %cst_32 = arith.constant dense<0.000000e+00> : vector<1xf32>
    %259 = vector.multi_reduction <add>, %252, %cst_32 [1] : vector<1x6xf32> to vector<1xf32>
    %260 = vector.shape_cast %259 : vector<1xf32> to vector<1x1xf32>
    %cst_33 = arith.constant 6.000000e+00 : f32
    %261 = vector.broadcast %cst_33 : f32 to vector<1x1xf32>
    %262 = arith.divf %260, %261 : vector<1x1xf32>
    %263 = vector.broadcast %262 : vector<1x1xf32> to vector<1x6xf32>
    %264 = arith.subf %252, %263 : vector<1x6xf32>
    %265 = arith.mulf %264, %264 : vector<1x6xf32>
    %cst_34 = arith.constant dense<0.000000e+00> : vector<1xf32>
    %266 = vector.multi_reduction <add>, %265, %cst_34 [1] : vector<1x6xf32> to vector<1xf32>
    %267 = vector.shape_cast %266 : vector<1xf32> to vector<1x1xf32>
    %cst_35 = arith.constant 5.000000e+00 : f32
    %268 = vector.broadcast %cst_35 : f32 to vector<1x1xf32>
    %269 = arith.divf %267, %268 : vector<1x1xf32>
    %270 = arith.mulf %262, %262 : vector<1x1xf32>
    %cst_36 = arith.constant 1.000000e-10 : f32
    %271 = vector.broadcast %cst_36 : f32 to vector<1x1xf32>
    %272 = arith.addf %270, %271 : vector<1x1xf32>
    %273 = arith.divf %269, %272 : vector<1x1xf32>
    %cst_37 = arith.constant dense<0.000000e+00> : vector<1xf32>
    %274 = vector.multi_reduction <add>, %258, %cst_37 [1] : vector<1x6xf32> to vector<1xf32>
    %275 = vector.shape_cast %274 : vector<1xf32> to vector<1x1xf32>
    %cst_38 = arith.constant 6.000000e+00 : f32
    %276 = vector.broadcast %cst_38 : f32 to vector<1x1xf32>
    %277 = arith.divf %275, %276 : vector<1x1xf32>
    %278 = vector.broadcast %277 : vector<1x1xf32> to vector<1x6xf32>
    %279 = arith.subf %258, %278 : vector<1x6xf32>
    %280 = arith.mulf %279, %279 : vector<1x6xf32>
    %cst_39 = arith.constant dense<0.000000e+00> : vector<1xf32>
    %281 = vector.multi_reduction <add>, %280, %cst_39 [1] : vector<1x6xf32> to vector<1xf32>
    %282 = vector.shape_cast %281 : vector<1xf32> to vector<1x1xf32>
    %cst_40 = arith.constant 5.000000e+00 : f32
    %283 = vector.broadcast %cst_40 : f32 to vector<1x1xf32>
    %284 = arith.divf %282, %283 : vector<1x1xf32>
    %285 = arith.mulf %277, %277 : vector<1x1xf32>
    %cst_41 = arith.constant 1.000000e-10 : f32
    %286 = vector.broadcast %cst_41 : f32 to vector<1x1xf32>
    %287 = arith.addf %285, %286 : vector<1x1xf32>
    %288 = arith.divf %284, %287 : vector<1x1xf32>
    %289 = arith.addf %273, %288 : vector<1x1xf32>
    %cst_42 = arith.constant 0.00999999977 : f32
    %290 = vector.broadcast %cst_42 : f32 to vector<1x1xf32>
    %291 = arith.mulf %289, %290 : vector<1x1xf32>
    %c0_43 = arith.constant 0 : index
    %c0_44 = arith.constant 0 : index
    %292 = vector.load %arg7[%c0_43, %c0_44] : memref<1x1xf32, #tpu.memory_space<vmem>>, vector<1x1xf32>
    tpu.vector_store %arg7[%c0_43, %c0_44], %291 {strides = array<i32>} : memref<1x1xf32, #tpu.memory_space<vmem>>, vector<1x1xf32>,
    %cst_45 = arith.constant dense<0.000000e+00> : vector<8xf32>
    %293 = vector.multi_reduction <add>, %250, %cst_45 [1] : vector<8x6xf32> to vector<8xf32>
    %294 = vector.shape_cast %293 : vector<8xf32> to vector<8x1xf32>
    %c0_46 = arith.constant 0 : index
    %c0_47 = arith.constant 0 : index
    %295 = vector.load %arg2[%c0_46, %c0_47] : memref<8x128xf32, #tpu.memory_space<vmem>>, vector<8x128xf32>
    %cst_48 = arith.constant 1.000000e+00 : f32
    %296 = vector.broadcast %cst_48 : f32 to vector<8x1xf32>
    %297 = arith.addf %296, %294 : vector<8x1xf32>
    %298 = vector.broadcast %297 : vector<8x1xf32> to vector<8x128xf32>
    %299 = arith.mulf %295, %298 : vector<8x128xf32>
    %c0_49 = arith.constant 0 : index
    %c0_50 = arith.constant 0 : index
    %300 = vector.load %arg6[%c0_49, %c0_50] : memref<8x128xf32, #tpu.memory_space<vmem>>, vector<8x128xf32>
    tpu.vector_store %arg6[%c0_49, %c0_50], %299 {strides = array<i32>} : memref<8x128xf32, #tpu.memory_space<vmem>>, vector<8x128xf32>,
    return
  }
  func.func @transform_0(%arg0: i32) -> (i32, i32) {
    %c0_i32 = arith.constant 0 : i32
    %c0_i32_0 = arith.constant 0 : i32
    %c0_i32_1 = arith.constant 0 : i32
    return %c0_i32, %c0_i32_0 : i32, i32
  }
  func.func @transform_1(%arg0: i32) -> (i32, i32) {
    %c0_i32 = arith.constant 0 : i32
    %c0_i32_0 = arith.constant 0 : i32
    %c0_i32_1 = arith.constant 0 : i32
    return %c0_i32, %c0_i32_0 : i32, i32
  }
  func.func @transform_2(%arg0: i32) -> (i32, i32) {
    %c0_i32 = arith.constant 0 : i32
    %c0_i32_0 = arith.constant 0 : i32
    %c0_i32_1 = arith.constant 0 : i32
    return %c0_i32, %c0_i32_0 : i32, i32
  }
  func.func @transform_3(%arg0: i32) -> (i32, i32) {
    %c0_i32 = arith.constant 0 : i32
    %c0_i32_0 = arith.constant 0 : i32
    %c0_i32_1 = arith.constant 0 : i32
    return %c0_i32, %c0_i32_0 : i32, i32
  }
  func.func @transform_4(%arg0: i32) -> i32 {
    %c0_i32 = arith.constant 0 : i32
    %c0_i32_0 = arith.constant 0 : i32
    return %c0_i32 : i32
  }
  func.func @transform_5(%arg0: i32) -> (i32, i32) {
    %c0_i32 = arith.constant 0 : i32
    %c0_i32_0 = arith.constant 0 : i32
    %c0_i32_1 = arith.constant 0 : i32
    return %c0_i32, %c0_i32_0 : i32, i32
  }
  func.func @transform_6(%arg0: i32) -> (i32, i32) {
    %c0_i32 = arith.constant 0 : i32
    %c0_i32_0 = arith.constant 0 : i32
    %c0_i32_1 = arith.constant 0 : i32
    return %c0_i32, %c0_i32_0 : i32, i32
  }
}

</mosaic_0001>

<llo_original>
// kernel: ams_forward.1
$region0: #{ams_forward.1}
  #allocation0 [shape = 'u32[]', space=smem, size = 0x4, offset = 0x4, fixed_abs, tag = 'smem constant byte address 0x4 - core index']
  #allocation1 [shape = 'u32[144,128]{1,0:T(1,128)}', space=vmem, size = 0x12000, scoped, tag = 'internal scratch']
  %s0 = inlined_call_operand.vmem [shape: f32[32,16], index: 0, kind: input, shape index: {}]
  %s1 = inlined_call_operand.vmem [shape: f32[8,128], index: 1, kind: input, shape index: {}, may-alias: {1,5}]
  %s2 = inlined_call_operand.vmem [shape: f32[16,896], index: 2, kind: input, shape index: {}]
  %s3 = inlined_call_operand.vmem [shape: f32[256,16], index: 3, kind: input, shape index: {}]
  %s4 = inlined_call_operand.vmem [shape: f32[8], index: 4, kind: input, shape index: {}]
  %s5 = inlined_call_operand.vmem [shape: f32[8,128], index: 5, kind: output, shape index: {0}, may-alias: {1,5}]
  %s6 = inlined_call_operand.hbm [shape: f32[1,1], index: 6, kind: output, shape index: {1}]
  %7 = xla_tuple %s5, %s6
  %s8 = sld [smem:[#allocation0]]
  $region42: #{ams_forward.1} parent=0
    _
  %s10 = ssub.s32 1, %s8
  %s11 = scalar_select 0, %s10, %s8
  $region1: #{ams_forward.1} parent=0
    #allocation2 [shape = 'u8[512]{0}', space=smem, size = 0x200, scoped, tag = 'input window, operand 4, single buffered']
    #allocation3 [shape = 's32[1]{0}', space=sflag, size = 0x4, scoped, tag = 'scoped memory for ams_forward.1']
    #allocation4 [shape = 's32[1]{0}', space=sflag, size = 0x4, scoped, tag = 'scoped memory for ams_forward.1']
    #allocation5 [shape = 'u8[512]{0}', space=vmem, size = 0x400, scoped, tag = 'output window, operand 1, single buffered']
    %12 = vsyncpa [#allocation4], 0
    %13 = vsyncpa [#allocation3], 0
    // Predicated region
    $region2: #{ams_forward.1} parent=1 // pred_check
      _
    $region3: #{ams_forward.1} parent=1 // pred_check_branch
      %15 = sbr.rel (0) target = $region5
    $region4: #{ams_forward.1} parent=1 // pred_region
      _
    $region5: #{ams_forward.1} parent=1 // pred_fallthru
      _
    // Predicated region
    $region6: #{ams_forward.1} parent=1 // pred_check
      _
    $region7: #{ams_forward.1} parent=1 // pred_check_branch
      %17 = sbr.rel (0) target = $region9
    $region8: #{ams_forward.1} parent=1 // pred_region
      _
    $region9: #{ams_forward.1} parent=1 // pred_fallthru
      _
    // Predicated region
    $region10: #{ams_forward.1} parent=1 // pred_check
      _
    $region11: #{ams_forward.1} parent=1 // pred_check_branch
      %19 = sbr.rel (0) target = $region13
    $region12: #{ams_forward.1} parent=1 // pred_region
      _
    $region13: #{ams_forward.1} parent=1 // pred_fallthru
      _
    // Predicated region
    $region14: #{ams_forward.1} parent=1 // pred_check
      _
    $region15: #{ams_forward.1} parent=1 // pred_check_branch
      %21 = sbr.rel (0) target = $region17
    $region16: #{ams_forward.1} parent=1 // pred_region
      _
    $region17: #{ams_forward.1} parent=1 // pred_fallthru
      _
    // Predicated region
    $region18: #{ams_forward.1} parent=1 // pred_check
      _
    $region19: #{ams_forward.1} parent=1 // pred_check_branch
      %23 = sbr.rel (0) target = $region21
    $region20: #{ams_forward.1} parent=1 // pred_region
      %s25 = ssub.s32 16, 16
      %26 = vsyncadd [#allocation4], %s25
      %s28 = sshll.u32 %s4, 4
      %s29 = int_to_ptr.vmem [resolvable:$true] %s28
      %31 = dma.vmem_to_smem %s29, 16, [#allocation2], [#allocation4]
    $region21: #{ams_forward.1} parent=1 // pred_fallthru
      _
    // Predicated region
    $region22: #{ams_forward.1} parent=1 // pred_check
      _
    $region23: #{ams_forward.1} parent=1 // pred_check_branch
      %33 = sbr.rel (0) target = $region25
    $region24: #{ams_forward.1} parent=1 // pred_region
      %34 = dma.done [#allocation4], 16
    $region25: #{ams_forward.1} parent=1 // pred_fallthru
      _
    %35 = sfence
    %v36 = vld [vmem:[%s0] sm:$0xff]
    %v37 = vld [vmem:[%s0 + $0x8] sm:$0xff]
    %v38 = vld [vmem:[%s0 + $0x10] sm:$0xff]
    %v39 = vld [vmem:[%s0 + $0x18] sm:$0xff]
    %v40 = vld [vmem:[%s2] sm:$0xff]
    %v41 = vld [vmem:[%s2 + $0x8] sm:$0xff]
    %v42 = vld [vmem:[%s2 + $0x10] sm:$0xff]
    %v43 = vld [vmem:[%s2 + $0x18] sm:$0xff]
    %v44 = vld [vmem:[%s2 + $0x20] sm:$0xff]
    %v45 = vld [vmem:[%s2 + $0x38] sm:$0xff]
    %v46 = vld [vmem:[%s2 + $0x40] sm:$0xff]
    %v47 = vld [vmem:[%s2 + $0x48] sm:$0xff]
    %v48 = vld [vmem:[%s2 + $0x50] sm:$0xff]
    %v49 = vld [vmem:[%s2 + $0x58] sm:$0xff]
    %vm50 = vcmask 130048
    %v52 = vsel %vm50, %v36, 0
    %v55 = vsel %vm50, %v37, 0
    %v58 = vsel %vm50, %v38, 0
    %v61 = vsel %vm50, %v39, 0
    %63 = vmatprep.subr.mxu0 %v41
    %64 = vmatpush1.msra.mxu0 %v40
    %65 = vmatprep.subr.mxu0 %v46
    %66 = vmatpush1.msra.mxu0 %v45
    %67 = vmatprep.subr.mxu0 0.0
    %68 = vmatpush1.msra.mxu0 0.0
    %69 = vmatprep.subr.mxu0 0.0
    %70 = vmatpush1.msra.mxu0 0.0
    %71 = vmatprep.subr.mxu0 0.0
    %72 = vmatpush1.msra.mxu0 0.0
    %73 = vmatprep.subr.mxu0 0.0
    %74 = vmatpush1.msra.mxu0 0.0
    %75 = vmatprep.subr.mxu0 0.0
    %76 = vmatpush1.msra.mxu0 0.0
    %77 = vmatprep.subr.mxu0 0.0
    %78 = vmatpush1.msra.mxu0 0.0
    %79 = vmatprep.subr.mxu0 0.0
    %80 = vmatpush1.msra.mxu0 0.0
    %81 = vmatprep.subr.mxu0 0.0
    %82 = vmatpush1.msra.mxu0 0.0
    %83 = vmatprep.subr.mxu0 0.0
    %84 = vmatpush1.msra.mxu0 0.0
    %85 = vmatprep.subr.mxu0 0.0
    %86 = vmatpush1.msra.mxu0 0.0
    %87 = vmatprep.subr.mxu0 0.0
    %88 = vmatpush1.msra.mxu0 0.0
    %89 = vmatprep.subr.mxu0 0.0
    %90 = vmatpush1.msra.mxu0 0.0
    %91 = vmatprep.subr.mxu0 0.0
    %92 = vmatpush1.msra.mxu0 0.0
    %93 = vmatprep.subr.mxu0 0.0
    %94 = vmatpush1.msra.mxu0 0.0
    %95 = vmatprep.subr.mxu0 0.0
    %96 = vmatpush1.msra.mxu0 0.0
    %97 = vmatprep.subr.mxu0 0.0
    %98 = vmatpush1.msra.mxu0 0.0
    %99 = vmatprep.subr.mxu0 0.0
    %100 = vmatpush1.msra.mxu0 0.0
    %101 = vmatprep.subr.mxu0 0.0
    %102 = vmatpush1.msra.mxu0 0.0
    %103 = vmatprep.subr.mxu0 0.0
    %104 = vmatpush1.msra.mxu0 0.0
    %105 = vmatprep.subr.mxu0 0.0
    %106 = vmatpush1.msra.mxu0 0.0
    %107 = vmatprep.subr.mxu0 0.0
    %108 = vmatpush1.msra.mxu0 0.0
    %109 = vmatprep.subr.mxu0 0.0
    %110 = vmatpush1.msra.mxu0 0.0
    %111 = vmatprep.subr.mxu0 0.0
    %112 = vmatpush1.msra.mxu0 0.0
    %113 = vmatprep.subr.mxu0 0.0
    %114 = vmatpush1.msra.mxu0 0.0
    %115 = vmatprep.subr.mxu0 0.0
    %116 = vmatpush1.msra.mxu0 0.0
    %117 = vmatprep.subr.mxu0 0.0
    %118 = vmatpush1.msra.mxu0 0.0
    %119 = vmatprep.subr.mxu0 0.0
    %120 = vmatpush1.msra.mxu0 0.0
    %121 = vmatprep.subr.mxu0 0.0
    %122 = vmatpush1.msra.mxu0 0.0
    %123 = vmatprep.subr.mxu0 0.0
    %124 = vmatpush1.msra.mxu0 0.0
    %125 = vmatprep.subr.mxu0 0.0
    %126 = vmatpush1.msra.mxu0 0.0
    %127 = vmatprep.mubr.f32.mxu0 0.0
    %128 = vmatmul.mubr.f32.gmra.mrb[0].mxu0 %v52
    %v129 = vpop.f32.mrb[0].mxu0
    %v130 = vadd.f32 0.0, %v129
    %v131 = vpop.f32.mrb[0].mxu0
    %v132 = vadd.f32 0.0, %v131
    %133 = vmatprep.mubr.f32.mxu0 0.0
    %134 = vmatmul.mubr.f32.gmra.mrb[0].mxu0 %v55
    %v135 = vpop.f32.mrb[0].mxu0
    %v136 = vadd.f32 0.0, %v135
    %v137 = vpop.f32.mrb[0].mxu0
    %v138 = vadd.f32 0.0, %v137
    %139 = vmatprep.mubr.f32.mxu0 0.0
    %140 = vmatmul.mubr.f32.gmra.mrb[0].mxu0 %v58
    %v141 = vpop.f32.mrb[0].mxu0
    %v142 = vadd.f32 0.0, %v141
    %v143 = vpop.f32.mrb[0].mxu0
    %v144 = vadd.f32 0.0, %v143
    %145 = vmatprep.mubr.f32.mxu0 0.0
    %146 = vmatmul.mubr.f32.gmra.mrb[0].mxu0 %v61
    %v147 = vpop.f32.mrb[0].mxu0
    %v148 = vadd.f32 0.0, %v147
    %v149 = vpop.f32.mrb[0].mxu0
    %v150 = vadd.f32 0.0, %v149
    %151 = vdwg.mxu0
    %152 = vmatprep.subr.mxu0 %v43
    %153 = vmatpush1.msra.mxu0 %v42
    %154 = vmatprep.subr.mxu0 %v48
    %155 = vmatpush1.msra.mxu0 %v47
    %156 = vmatprep.subr.mxu0 0.0
    %157 = vmatpush1.msra.mxu0 0.0
    %158 = vmatprep.subr.mxu0 0.0
    %159 = vmatpush1.msra.mxu0 0.0
    %160 = vmatprep.subr.mxu0 0.0
    %161 = vmatpush1.msra.mxu0 0.0
    %162 = vmatprep.subr.mxu0 0.0
    %163 = vmatpush1.msra.mxu0 0.0
    %164 = vmatprep.subr.mxu0 0.0
    %165 = vmatpush1.msra.mxu0 0.0
    %166 = vmatprep.subr.mxu0 0.0
    %167 = vmatpush1.msra.mxu0 0.0
    %168 = vmatprep.subr.mxu0 0.0
    %169 = vmatpush1.msra.mxu0 0.0
    %170 = vmatprep.subr.mxu0 0.0
    %171 = vmatpush1.msra.mxu0 0.0
    %172 = vmatprep.subr.mxu0 0.0
    %173 = vmatpush1.msra.mxu0 0.0
    %174 = vmatprep.subr.mxu0 0.0
    %175 = vmatpush1.msra.mxu0 0.0
    %176 = vmatprep.subr.mxu0 0.0
    %177 = vmatpush1.msra.mxu0 0.0
    %178 = vmatprep.subr.mxu0 0.0
    %179 = vmatpush1.msra.mxu0 0.0
    %180 = vmatprep.subr.mxu0 0.0
    %181 = vmatpush1.msra.mxu0 0.0
    %182 = vmatprep.subr.mxu0 0.0
    %183 = vmatpush1.msra.mxu0 0.0
    %184 = vmatprep.subr.mxu0 0.0
    %185 = vmatpush1.msra.mxu0 0.0
    %186 = vmatprep.subr.mxu0 0.0
    %187 = vmatpush1.msra.mxu0 0.0
    %188 = vmatprep.subr.mxu0 0.0
    %189 = vmatpush1.msra.mxu0 0.0
    %190 = vmatprep.subr.mxu0 0.0
    %191 = vmatpush1.msra.mxu0 0.0
    %192 = vmatprep.subr.mxu0 0.0
    %193 = vmatpush1.msra.mxu0 0.0
    %194 = vmatprep.subr.mxu0 0.0
    %195 = vmatpush1.msra.mxu0 0.0
    %196 = vmatprep.subr.mxu0 0.0
    %197 = vmatpush1.msra.mxu0 0.0
    %198 = vmatprep.subr.mxu0 0.0
    %199 = vmatpush1.msra.mxu0 0.0
    %200 = vmatprep.subr.mxu0 0.0
    %201 = vmatpush1.msra.mxu0 0.0
    %202 = vmatprep.subr.mxu0 0.0
    %203 = vmatpush1.msra.mxu0 0.0
    %204 = vmatprep.subr.mxu0 0.0
    %205 = vmatpush1.msra.mxu0 0.0
    %206 = vmatprep.subr.mxu0 0.0
    %207 = vmatpush1.msra.mxu0 0.0
    %208 = vmatprep.subr.mxu0 0.0
    %209 = vmatpush1.msra.mxu0 0.0
    %210 = vmatprep.subr.mxu0 0.0
    %211 = vmatpush1.msra.mxu0 0.0
    %212 = vmatprep.subr.mxu0 0.0
    %213 = vmatpush1.msra.mxu0 0.0
    %214 = vmatprep.subr.mxu0 0.0
    %215 = vmatpush1.msra.mxu0 0.0
    %216 = vmatprep.mubr.f32.mxu0 0.0
    %217 = vmatmul.mubr.f32.gmra.mrb[0].mxu0 %v52
    %v218 = vpop.f32.mrb[0].mxu0
    %v219 = vadd.f32 0.0, %v218
    %v220 = vpop.f32.mrb[0].mxu0
    %v221 = vadd.f32 0.0, %v220
    %222 = vmatprep.mubr.f32.mxu0 0.0
    %223 = vmatmul.mubr.f32.gmra.mrb[0].mxu0 %v55
    %v224 = vpop.f32.mrb[0].mxu0
    %v225 = vadd.f32 0.0, %v224
    %v226 = vpop.f32.mrb[0].mxu0
    %v227 = vadd.f32 0.0, %v226
    %228 = vmatprep.mubr.f32.mxu0 0.0
    %229 = vmatmul.mubr.f32.gmra.mrb[0].mxu0 %v58
    %v230 = vpop.f32.mrb[0].mxu0
    %v231 = vadd.f32 0.0, %v230
    %v232 = vpop.f32.mrb[0].mxu0
    %v233 = vadd.f32 0.0, %v232
    %234 = vmatprep.mubr.f32.mxu0 0.0
    %235 = vmatmul.mubr.f32.gmra.mrb[0].mxu0 %v61
    %v236 = vpop.f32.mrb[0].mxu0
    %v237 = vadd.f32 0.0, %v236
    %v238 = vpop.f32.mrb[0].mxu0
    %v239 = vadd.f32 0.0, %v238
    %240 = vdwg.mxu0
    %241 = vmatprep.subr.mxu0 0.0
    %242 = vmatpush1.msra.mxu0 %v44
    %243 = vmatprep.subr.mxu0 0.0
    %244 = vmatpush1.msra.mxu0 %v49
    %245 = vmatprep.subr.mxu0 0.0
    %246 = vmatpush1.msra.mxu0 0.0
    %247 = vmatprep.subr.mxu0 0.0
    %248 = vmatpush1.msra.mxu0 0.0
    %249 = vmatprep.subr.mxu0 0.0
    %250 = vmatpush1.msra.mxu0 0.0
    %251 = vmatprep.subr.mxu0 0.0
    %252 = vmatpush1.msra.mxu0 0.0
    %253 = vmatprep.subr.mxu0 0.0
    %254 = vmatpush1.msra.mxu0 0.0
    %255 = vmatprep.subr.mxu0 0.0
    %256 = vmatpush1.msra.mxu0 0.0
    %257 = vmatprep.subr.mxu0 0.0
    %258 = vmatpush1.msra.mxu0 0.0
    %259 = vmatprep.subr.mxu0 0.0
    %260 = vmatpush1.msra.mxu0 0.0
    %261 = vmatprep.subr.mxu0 0.0
    %262 = vmatpush1.msra.mxu0 0.0
    %263 = vmatprep.subr.mxu0 0.0
    %264 = vmatpush1.msra.mxu0 0.0
    %265 = vmatprep.subr.mxu0 0.0
    %266 = vmatpush1.msra.mxu0 0.0
    %267 = vmatprep.subr.mxu0 0.0
    %268 = vmatpush1.msra.mxu0 0.0
    %269 = vmatprep.subr.mxu0 0.0
    %270 = vmatpush1.msra.mxu0 0.0
    %271 = vmatprep.subr.mxu0 0.0
    %272 = vmatpush1.msra.mxu0 0.0
    %273 = vmatprep.subr.mxu0 0.0
    %274 = vmatpush1.msra.mxu0 0.0
    %275 = vmatprep.subr.mxu0 0.0
    %276 = vmatpush1.msra.mxu0 0.0
    %277 = vmatprep.subr.mxu0 0.0
    %278 = vmatpush1.msra.mxu0 0.0
    %279 = vmatprep.subr.mxu0 0.0
    %280 = vmatpush1.msra.mxu0 0.0
    %281 = vmatprep.subr.mxu0 0.0
    %282 = vmatpush1.msra.mxu0 0.0
    %283 = vmatprep.subr.mxu0 0.0
    %284 = vmatpush1.msra.mxu0 0.0
    %285 = vmatprep.subr.mxu0 0.0
    %286 = vmatpush1.msra.mxu0 0.0
    %287 = vmatprep.subr.mxu0 0.0
    %288 = vmatpush1.msra.mxu0 0.0
    %289 = vmatprep.subr.mxu0 0.0
    %290 = vmatpush1.msra.mxu0 0.0
    %291 = vmatprep.subr.mxu0 0.0
    %292 = vmatpush1.msra.mxu0 0.0
    %293 = vmatprep.subr.mxu0 0.0
    %294 = vmatpush1.msra.mxu0 0.0
    %295 = vmatprep.subr.mxu0 0.0
    %296 = vmatpush1.msra.mxu0 0.0
    %297 = vmatprep.subr.mxu0 0.0
    %298 = vmatpush1.msra.mxu0 0.0
    %299 = vmatprep.subr.mxu0 0.0
    %300 = vmatpush1.msra.mxu0 0.0
    %301 = vmatprep.subr.mxu0 0.0
    %302 = vmatpush1.msra.mxu0 0.0
    %303 = vmatprep.subr.mxu0 0.0
    %304 = vmatpush1.msra.mxu0 0.0
    %305 = vmatprep.mubr.f32.mxu0 0.0
    %306 = vmatmul.mubr.f32.gmra.mrb[0].mxu0 %v52
    %v307 = vpop.f32.mrb[0].mxu0
    %v308 = vadd.f32 0.0, %v307
    %v309 = vpop.f32.mrb[0].mxu0
    %310 = vmatprep.mubr.f32.mxu0 0.0
    %311 = vmatmul.mubr.f32.gmra.mrb[0].mxu0 %v55
    %v312 = vpop.f32.mrb[0].mxu0
    %v313 = vadd.f32 0.0, %v312
    %v314 = vpop.f32.mrb[0].mxu0
    %315 = vmatprep.mubr.f32.mxu0 0.0
    %316 = vmatmul.mubr.f32.gmra.mrb[0].mxu0 %v58
    %v317 = vpop.f32.mrb[0].mxu0
    %v318 = vadd.f32 0.0, %v317
    %v319 = vpop.f32.mrb[0].mxu0
    %320 = vmatprep.mubr.f32.mxu0 0.0
    %321 = vmatmul.mubr.f32.gmra.mrb[0].mxu0 %v61
    %v322 = vpop.f32.mrb[0].mxu0
    %v323 = vadd.f32 0.0, %v322
    %v324 = vpop.f32.mrb[0].mxu0
    %325 = vdwg.mxu0
    %s326 = sld [smem:[#allocation2]]
    %v327 = vstv %s326
    %v328 = vmul.f32 %v36, %v327
    %v329 = vmul.f32 %v37, %v327
    %v330 = vmul.f32 %v38, %v327
    %v331 = vmul.f32 %v39, %v327
    %s332 = sld [smem:[#allocation2 + $0x3]]
    %v333 = vstv %s332
    %v334 = vadd.f32 %v328, %v333
    %v335 = vadd.f32 %v329, %v333
    %v336 = vadd.f32 %v330, %v333
    %v337 = vadd.f32 %v331, %v333
    %s338 = sld [smem:[#allocation2 + $0x1]]
    %v339 = vstv %s338
    %v340 = vmul.f32 %v36, %v339
    %v341 = vmul.f32 %v37, %v339
    %v342 = vmul.f32 %v38, %v339
    %v343 = vmul.f32 %v39, %v339
    %s344 = sld [smem:[#allocation2 + $0x4]]
    %v345 = vstv %s344
    %v346 = vadd.f32 %v340, %v345
    %v347 = vadd.f32 %v341, %v345
    %v348 = vadd.f32 %v342, %v345
    %v349 = vadd.f32 %v343, %v345
    %s350 = sld [smem:[#allocation2 + $0x2]]
    %v351 = vstv %s350
    %v352 = vmul.f32 %v36, %v351
    %v353 = vmul.f32 %v37, %v351
    %v354 = vmul.f32 %v38, %v351
    %v355 = vmul.f32 %v39, %v351
    %s356 = sld [smem:[#allocation2 + $0x5]]
    %v357 = vstv %s356
    %v358 = vadd.f32 %v352, %v357
    %v359 = vadd.f32 %v353, %v357
    %v360 = vadd.f32 %v354, %v357
    %v361 = vadd.f32 %v355, %v357
    %v362 = vmax.f32 %v334, %v346
    %v363 = vmax.f32 %v335, %v347
    %v364 = vmax.f32 %v336, %v348
    %v365 = vmax.f32 %v337, %v349
    %v366 = vmax.f32 %v362, %v358
    %v367 = vmax.f32 %v363, %v359
    %v368 = vmax.f32 %v364, %v360
    %v369 = vmax.f32 %v365, %v361
    %v370 = vsub.f32 %v334, %v366
    %v371 = vsub.f32 %v335, %v367
    %v372 = vsub.f32 %v336, %v368
    %v373 = vsub.f32 %v337, %v369
    %v374 = vmul.f32 %v370, 1.442695
    %v375 = vpow.pop %v374
    %v376 = vmul.f32 %v371, 1.442695
    %v377 = vpow.pop %v376
    %v378 = vmul.f32 %v372, 1.442695
    %v379 = vpow.pop %v378
    %v380 = vmul.f32 %v373, 1.442695
    %v381 = vpow.pop %v380
    %v382 = vsub.f32 %v346, %v366
    %v383 = vsub.f32 %v347, %v367
    %v384 = vsub.f32 %v348, %v368
    %v385 = vsub.f32 %v349, %v369
    %v386 = vmul.f32 %v382, 1.442695
    %v387 = vpow.pop %v386
    %v388 = vmul.f32 %v383, 1.442695
    %v389 = vpow.pop %v388
    %v390 = vmul.f32 %v384, 1.442695
    %v391 = vpow.pop %v390
    %v392 = vmul.f32 %v385, 1.442695
    %v393 = vpow.pop %v392
    %v394 = vsub.f32 %v358, %v366
    %v395 = vsub.f32 %v359, %v367
    %v396 = vsub.f32 %v360, %v368
    %v397 = vsub.f32 %v361, %v369
    %v398 = vmul.f32 %v394, 1.442695
    %v399 = vpow.pop %v398
    %v400 = vmul.f32 %v395, 1.442695
    %v401 = vpow.pop %v400
    %v402 = vmul.f32 %v396, 1.442695
    %v403 = vpow.pop %v402
    %v404 = vmul.f32 %v397, 1.442695
    %v405 = vpow.pop %v404
    %v406 = vmul.f32 %v375, %v130
    %v407 = vmul.f32 %v377, %v136
    %v408 = vmul.f32 %v379, %v142
    %v409 = vmul.f32 %v381, %v148
    %v410 = vadd.f32 %v375, %v387
    %v411 = vadd.f32 %v377, %v389
    %v412 = vadd.f32 %v379, %v391
    %v413 = vadd.f32 %v381, %v393
    %v414 = vmul.f32 %v387, %v132
    %v415 = vmul.f32 %v389, %v138
    %v416 = vmul.f32 %v391, %v144
    %v417 = vmul.f32 %v393, %v150
    %v418 = vadd.f32 %v406, %v414
    %v419 = vadd.f32 %v407, %v415
    %v420 = vadd.f32 %v408, %v416
    %v421 = vadd.f32 %v409, %v417
    %v422 = vadd.f32 %v410, %v399
    %v423 = vadd.f32 %v411, %v401
    %v424 = vadd.f32 %v412, %v403
    %v425 = vadd.f32 %v413, %v405
    %v426 = vmul.f32 %v399, %v219
    %v427 = vmul.f32 %v401, %v225
    %v428 = vmul.f32 %v403, %v231
    %v429 = vmul.f32 %v405, %v237
    %v430 = vadd.f32 %v418, %v426
    %v431 = vadd.f32 %v419, %v427
    %v432 = vadd.f32 %v420, %v428
    %v433 = vadd.f32 %v421, %v429
    %v434 = vrcp.pop %v422
    %v435 = vmul.f32 %v430, %v434
    %v436 = vrcp.pop %v423
    %v437 = vmul.f32 %v431, %v436
    %v438 = vrcp.pop %v424
    %v439 = vmul.f32 %v432, %v438
    %v440 = vrcp.pop %v425
    %v441 = vmul.f32 %v433, %v440
    %v442 = vmul.f32 %v221, %v221
    %v443 = vmul.f32 %v227, %v227
    %v444 = vmul.f32 %v233, %v233
    %v445 = vmul.f32 %v239, %v239
    %v446 = vmul.f32 %v308, %v308
    %v447 = vmul.f32 %v313, %v313
    %v448 = vmul.f32 %v318, %v318
    %v449 = vmul.f32 %v323, %v323
    %v450 = vadd.f32 %v442, %v446
    %v451 = vadd.f32 %v443, %v447
    %v452 = vadd.f32 %v444, %v448
    %v453 = vadd.f32 %v445, %v449
    %v454 = vlaneseq
    %v455 = vand.u32 %v454, 127
    %vm456 = vcmp.lt.s32.totalorder %v455, 7
    %v457 = vsel %vm456, %v450, -1.0
    %v458 = vsel %vm456, %v451, -1.0
    %v459 = vsel %vm456, %v452, -1.0
    %v460 = vsel %vm456, %v453, -1.0
    %462 = vset.pattern.permute.xlu0 0
    %463 = vperm.xlu0 %462, %v457
    %v464 = vpop.permute.xlu0 %463
    %467 = vset.pattern.permute.xlu0 0
    %468 = vperm.xlu0 %467, %v458
    %v469 = vpop.permute.xlu0 %468
    %472 = vset.pattern.permute.xlu0 0
    %473 = vperm.xlu0 %472, %v459
    %v474 = vpop.permute.xlu0 %473
    %477 = vset.pattern.permute.xlu0 0
    %478 = vperm.xlu0 %477, %v460
    %v479 = vpop.permute.xlu0 %478
    %vm481 = vcmp.gt.f32.partialorder %v464, %v457
    %vm482 = vcmp.gt.f32.partialorder %v469, %v458
    %vm483 = vcmp.gt.f32.partialorder %v474, %v459
    %vm484 = vcmp.gt.f32.partialorder %v479, %v460
    %vm485 = vcmp.eq.f32.partialorder %v464, %v457
    %vm486 = vcmp.eq.f32.partialorder %v469, %v458
    %vm487 = vcmp.eq.f32.partialorder %v474, %v459
    %vm488 = vcmp.eq.f32.partialorder %v479, %v460
    %vm489 = vcmp.gt.s32.totalorder %v455, 0
    %vm490 = vmand %vm485, %vm489
    %vm491 = vmand %vm486, %vm489
    %vm492 = vmand %vm487, %vm489
    %vm493 = vmand %vm488, %vm489
    %vm494 = vmor %vm481, %vm490
    %vm495 = vmor %vm482, %vm491
    %vm496 = vmor %vm483, %vm492
    %vm497 = vmor %vm484, %vm493
    %v498 = vsel %vm494, 1, 0
    %v499 = vsel %vm495, 1, 0
    %v500 = vsel %vm496, 1, 0
    %v501 = vsel %vm497, 1, 0
    %v502 = vcvt.s32.f32 %v498
    %v503 = vcvt.s32.f32 %v499
    %v504 = vcvt.s32.f32 %v500
    %v505 = vcvt.s32.f32 %v501
    %v506 = vadd.f32 %v502, 0.0
    %v507 = vadd.f32 %v503, 0.0
    %v508 = vadd.f32 %v504, 0.0
    %v509 = vadd.f32 %v505, 0.0
    %510 = vset.pattern.permute.xlu0 1
    %511 = vperm.xlu0 %510, %v457
    %v512 = vpop.permute.xlu0 %511
    %514 = vset.pattern.permute.xlu0 1
    %515 = vperm.xlu0 %514, %v458
    %v516 = vpop.permute.xlu0 %515
    %518 = vset.pattern.permute.xlu0 1
    %519 = vperm.xlu0 %518, %v459
    %v520 = vpop.permute.xlu0 %519
    %522 = vset.pattern.permute.xlu0 1
    %523 = vperm.xlu0 %522, %v460
    %v524 = vpop.permute.xlu0 %523
    %vm526 = vcmp.gt.f32.partialorder %v512, %v457
    %vm527 = vcmp.gt.f32.partialorder %v516, %v458
    %vm528 = vcmp.gt.f32.partialorder %v520, %v459
    %vm529 = vcmp.gt.f32.partialorder %v524, %v460
    %vm530 = vcmp.eq.f32.partialorder %v512, %v457
    %vm531 = vcmp.eq.f32.partialorder %v516, %v458
    %vm532 = vcmp.eq.f32.partialorder %v520, %v459
    %vm533 = vcmp.eq.f32.partialorder %v524, %v460
    %vm534 = vcmp.gt.s32.totalorder %v455, 1
    %vm535 = vmand %vm530, %vm534
    %vm536 = vmand %vm531, %vm534
    %vm537 = vmand %vm532, %vm534
    %vm538 = vmand %vm533, %vm534
    %vm539 = vmor %vm526, %vm535
    %vm540 = vmor %vm527, %vm536
    %vm541 = vmor %vm528, %vm537
    %vm542 = vmor %vm529, %vm538
    %v543 = vsel %vm539, 1, 0
    %v544 = vsel %vm540, 1, 0
    %v545 = vsel %vm541, 1, 0
    %v546 = vsel %vm542, 1, 0
    %v547 = vcvt.s32.f32 %v543
    %v548 = vcvt.s32.f32 %v544
    %v549 = vcvt.s32.f32 %v545
    %v550 = vcvt.s32.f32 %v546
    %v551 = vadd.f32 %v506, %v547
    %v552 = vadd.f32 %v507, %v548
    %v553 = vadd.f32 %v508, %v549
    %v554 = vadd.f32 %v509, %v550
    %555 = vset.pattern.permute.xlu0 2
    %556 = vperm.xlu0 %555, %v457
    %v557 = vpop.permute.xlu0 %556
    %559 = vset.pattern.permute.xlu0 2
    %560 = vperm.xlu0 %559, %v458
    %v561 = vpop.permute.xlu0 %560
    %563 = vset.pattern.permute.xlu0 2
    %564 = vperm.xlu0 %563, %v459
    %v565 = vpop.permute.xlu0 %564
    %567 = vset.pattern.permute.xlu0 2
    %568 = vperm.xlu0 %567, %v460
    %v569 = vpop.permute.xlu0 %568
    %vm571 = vcmp.gt.f32.partialorder %v557, %v457
    %vm572 = vcmp.gt.f32.partialorder %v561, %v458
    %vm573 = vcmp.gt.f32.partialorder %v565, %v459
    %vm574 = vcmp.gt.f32.partialorder %v569, %v460
    %vm575 = vcmp.eq.f32.partialorder %v557, %v457
    %vm576 = vcmp.eq.f32.partialorder %v561, %v458
    %vm577 = vcmp.eq.f32.partialorder %v565, %v459
    %vm578 = vcmp.eq.f32.partialorder %v569, %v460
    %vm579 = vcmp.gt.s32.totalorder %v455, 2
    %vm580 = vmand %vm575, %vm579
    %vm581 = vmand %vm576, %vm579
    %vm582 = vmand %vm577, %vm579
    %vm583 = vmand %vm578, %vm579
    %vm584 = vmor %vm571, %vm580
    %vm585 = vmor %vm572, %vm581
    %vm586 = vmor %vm573, %vm582
    %vm587 = vmor %vm574, %vm583
    %v588 = vsel %vm584, 1, 0
    %v589 = vsel %vm585, 1, 0
    %v590 = vsel %vm586, 1, 0
    %v591 = vsel %vm587, 1, 0
    %v592 = vcvt.s32.f32 %v588
    %v593 = vcvt.s32.f32 %v589
    %v594 = vcvt.s32.f32 %v590
    %v595 = vcvt.s32.f32 %v591
    %v596 = vadd.f32 %v551, %v592
    %v597 = vadd.f32 %v552, %v593
    %v598 = vadd.f32 %v553, %v594
    %v599 = vadd.f32 %v554, %v595
    %600 = vset.pattern.permute.xlu0 3
    %601 = vperm.xlu0 %600, %v457
    %v602 = vpop.permute.xlu0 %601
    %604 = vset.pattern.permute.xlu0 3
    %605 = vperm.xlu0 %604, %v458
    %v606 = vpop.permute.xlu0 %605
    %608 = vset.pattern.permute.xlu0 3
    %609 = vperm.xlu0 %608, %v459
    %v610 = vpop.permute.xlu0 %609
    %612 = vset.pattern.permute.xlu0 3
    %613 = vperm.xlu0 %612, %v460
    %v614 = vpop.permute.xlu0 %613
    %vm616 = vcmp.gt.f32.partialorder %v602, %v457
    %vm617 = vcmp.gt.f32.partialorder %v606, %v458
    %vm618 = vcmp.gt.f32.partialorder %v610, %v459
    %vm619 = vcmp.gt.f32.partialorder %v614, %v460
    %vm620 = vcmp.eq.f32.partialorder %v602, %v457
    %vm621 = vcmp.eq.f32.partialorder %v606, %v458
    %vm622 = vcmp.eq.f32.partialorder %v610, %v459
    %vm623 = vcmp.eq.f32.partialorder %v614, %v460
    %vm624 = vcmp.gt.s32.totalorder %v455, 3
    %vm625 = vmand %vm620, %vm624
    %vm626 = vmand %vm621, %vm624
    %vm627 = vmand %vm622, %vm624
    %vm628 = vmand %vm623, %vm624
    %vm629 = vmor %vm616, %vm625
    %vm630 = vmor %vm617, %vm626
    %vm631 = vmor %vm618, %vm627
    %vm632 = vmor %vm619, %vm628
    %v633 = vsel %vm629, 1, 0
    %v634 = vsel %vm630, 1, 0
    %v635 = vsel %vm631, 1, 0
    %v636 = vsel %vm632, 1, 0
    %v637 = vcvt.s32.f32 %v633
    %v638 = vcvt.s32.f32 %v634
    %v639 = vcvt.s32.f32 %v635
    %v640 = vcvt.s32.f32 %v636
    %v641 = vadd.f32 %v596, %v637
    %v642 = vadd.f32 %v597, %v638
    %v643 = vadd.f32 %v598, %v639
    %v644 = vadd.f32 %v599, %v640
    %645 = vset.pattern.permute.xlu0 4
    %646 = vperm.xlu0 %645, %v457
    %v647 = vpop.permute.xlu0 %646
    %649 = vset.pattern.permute.xlu0 4
    %650 = vperm.xlu0 %649, %v458
    %v651 = vpop.permute.xlu0 %650
    %653 = vset.pattern.permute.xlu0 4
    %654 = vperm.xlu0 %653, %v459
    %v655 = vpop.permute.xlu0 %654
    %657 = vset.pattern.permute.xlu0 4
    %658 = vperm.xlu0 %657, %v460
    %v659 = vpop.permute.xlu0 %658
    %vm661 = vcmp.gt.f32.partialorder %v647, %v457
    %vm662 = vcmp.gt.f32.partialorder %v651, %v458
    %vm663 = vcmp.gt.f32.partialorder %v655, %v459
    %vm664 = vcmp.gt.f32.partialorder %v659, %v460
    %vm665 = vcmp.eq.f32.partialorder %v647, %v457
    %vm666 = vcmp.eq.f32.partialorder %v651, %v458
    %vm667 = vcmp.eq.f32.partialorder %v655, %v459
    %vm668 = vcmp.eq.f32.partialorder %v659, %v460
    %vm669 = vcmp.gt.s32.totalorder %v455, 4
    %vm670 = vmand %vm665, %vm669
    %vm671 = vmand %vm666, %vm669
    %vm672 = vmand %vm667, %vm669
    %vm673 = vmand %vm668, %vm669
    %vm674 = vmor %vm661, %vm670
    %vm675 = vmor %vm662, %vm671
    %vm676 = vmor %vm663, %vm672
    %vm677 = vmor %vm664, %vm673
    %v678 = vsel %vm674, 1, 0
    %v679 = vsel %vm675, 1, 0
    %v680 = vsel %vm676, 1, 0
    %v681 = vsel %vm677, 1, 0
    %v682 = vcvt.s32.f32 %v678
    %v683 = vcvt.s32.f32 %v679
    %v684 = vcvt.s32.f32 %v680
    %v685 = vcvt.s32.f32 %v681
    %v686 = vadd.f32 %v641, %v682
    %v687 = vadd.f32 %v642, %v683
    %v688 = vadd.f32 %v643, %v684
    %v689 = vadd.f32 %v644, %v685
    %690 = vset.pattern.permute.xlu0 5
    %691 = vperm.xlu0 %690, %v457
    %v692 = vpop.permute.xlu0 %691
    %694 = vset.pattern.permute.xlu0 5
    %695 = vperm.xlu0 %694, %v458
    %v696 = vpop.permute.xlu0 %695
    %698 = vset.pattern.permute.xlu0 5
    %699 = vperm.xlu0 %698, %v459
    %v700 = vpop.permute.xlu0 %699
    %702 = vset.pattern.permute.xlu0 5
    %703 = vperm.xlu0 %702, %v460
    %v704 = vpop.permute.xlu0 %703
    %vm706 = vcmp.gt.f32.partialorder %v692, %v457
    %vm707 = vcmp.gt.f32.partialorder %v696, %v458
    %vm708 = vcmp.gt.f32.partialorder %v700, %v459
    %vm709 = vcmp.gt.f32.partialorder %v704, %v460
    %vm710 = vcmp.eq.f32.partialorder %v692, %v457
    %vm711 = vcmp.eq.f32.partialorder %v696, %v458
    %vm712 = vcmp.eq.f32.partialorder %v700, %v459
    %vm713 = vcmp.eq.f32.partialorder %v704, %v460
    %vm714 = vcmp.gt.s32.totalorder %v455, 5
    %vm715 = vmand %vm710, %vm714
    %vm716 = vmand %vm711, %vm714
    %vm717 = vmand %vm712, %vm714
    %vm718 = vmand %vm713, %vm714
    %vm719 = vmor %vm706, %vm715
    %vm720 = vmor %vm707, %vm716
    %vm721 = vmor %vm708, %vm717
    %vm722 = vmor %vm709, %vm718
    %v723 = vsel %vm719, 1, 0
    %v724 = vsel %vm720, 1, 0
    %v725 = vsel %vm721, 1, 0
    %v726 = vsel %vm722, 1, 0
    %v727 = vcvt.s32.f32 %v723
    %v728 = vcvt.s32.f32 %v724
    %v729 = vcvt.s32.f32 %v725
    %v730 = vcvt.s32.f32 %v726
    %v731 = vadd.f32 %v686, %v727
    %v732 = vadd.f32 %v687, %v728
    %v733 = vadd.f32 %v688, %v729
    %v734 = vadd.f32 %v689, %v730
    %735 = vset.pattern.permute.xlu0 6
    %736 = vperm.xlu0 %735, %v457
    %v737 = vpop.permute.xlu0 %736
    %739 = vset.pattern.permute.xlu0 6
    %740 = vperm.xlu0 %739, %v458
    %v741 = vpop.permute.xlu0 %740
    %743 = vset.pattern.permute.xlu0 6
    %744 = vperm.xlu0 %743, %v459
    %v745 = vpop.permute.xlu0 %744
    %747 = vset.pattern.permute.xlu0 6
    %748 = vperm.xlu0 %747, %v460
    %v749 = vpop.permute.xlu0 %748
    %vm751 = vcmp.gt.f32.partialorder %v737, %v457
    %vm752 = vcmp.gt.f32.partialorder %v741, %v458
    %vm753 = vcmp.gt.f32.partialorder %v745, %v459
    %vm754 = vcmp.gt.f32.partialorder %v749, %v460
    %vm755 = vcmp.eq.f32.partialorder %v737, %v457
    %vm756 = vcmp.eq.f32.partialorder %v741, %v458
    %vm757 = vcmp.eq.f32.partialorder %v745, %v459
    %vm758 = vcmp.eq.f32.partialorder %v749, %v460
    %vm759 = vcmp.gt.s32.totalorder %v455, 6
    %vm760 = vmand %vm755, %vm759
    %vm761 = vmand %vm756, %vm759
    %vm762 = vmand %vm757, %vm759
    %vm763 = vmand %vm758, %vm759
    %vm764 = vmor %vm751, %vm760
    %vm765 = vmor %vm752, %vm761
    %vm766 = vmor %vm753, %vm762
    %vm767 = vmor %vm754, %vm763
    %v768 = vsel %vm764, 1, 0
    %v769 = vsel %vm765, 1, 0
    %v770 = vsel %vm766, 1, 0
    %v771 = vsel %vm767, 1, 0
    %v772 = vcvt.s32.f32 %v768
    %v773 = vcvt.s32.f32 %v769
    %v774 = vcvt.s32.f32 %v770
    %v775 = vcvt.s32.f32 %v771
    %v776 = vadd.f32 %v731, %v772
    %v777 = vadd.f32 %v732, %v773
    %v778 = vadd.f32 %v733, %v774
    %v779 = vadd.f32 %v734, %v775
    %vm780 = vcmp.lt.f32.partialorder %v776, 3.0
    %vm781 = vcmp.lt.f32.partialorder %v777, 3.0
    %vm782 = vcmp.lt.f32.partialorder %v778, 3.0
    %vm783 = vcmp.lt.f32.partialorder %v779, 3.0
    %vm784 = vmand %vm780, %vm456
    %vm785 = vmand %vm781, %vm456
    %vm786 = vmand %vm782, %vm456
    %vm787 = vmand %vm783, %vm456
    %v788 = vsel %vm784, 1, 0
    %v789 = vsel %vm785, 1, 0
    %v790 = vsel %vm786, 1, 0
    %v791 = vsel %vm787, 1, 0
    %v792 = vcvt.s32.f32 %v788
    %v793 = vcvt.s32.f32 %v789
    %v794 = vcvt.s32.f32 %v790
    %v795 = vcvt.s32.f32 %v791
    %v796 = vmul.f32 %v792, %v221
    %v797 = vmul.f32 %v793, %v227
    %v798 = vmul.f32 %v794, %v233
    %v799 = vmul.f32 %v795, %v239
    %v800 = vmul.f32 %v792, %v308
    %v801 = vmul.f32 %v793, %v313
    %v802 = vmul.f32 %v794, %v318
    %v803 = vmul.f32 %v795, %v323
    %v804 = vld [vmem:[%s3] sm:$0xff]
    %v805 = vld [vmem:[%s3 + $0x8] sm:$0xff]
    %v806 = vld [vmem:[%s3 + $0x10] sm:$0xff]
    %v807 = vld [vmem:[%s3 + $0x18] sm:$0xff]
    %v808 = vld [vmem:[%s3 + $0x20] sm:$0xff]
    %v809 = vld [vmem:[%s3 + $0x28] sm:$0xff]
    %v810 = vld [vmem:[%s3 + $0x30] sm:$0xff]
    %v811 = vld [vmem:[%s3 + $0x38] sm:$0xff]
    %v812 = vld [vmem:[%s3 + $0x40] sm:$0xff]
    %v813 = vld [vmem:[%s3 + $0x48] sm:$0xff]
    %v814 = vld [vmem:[%s3 + $0x50] sm:$0xff]
    %v815 = vld [vmem:[%s3 + $0x58] sm:$0xff]
    %v816 = vld [vmem:[%s3 + $0x60] sm:$0xff]
    %v817 = vld [vmem:[%s3 + $0x68] sm:$0xff]
    %v818 = vld [vmem:[%s3 + $0x70] sm:$0xff]
    %v819 = vld [vmem:[%s3 + $0x78] sm:$0xff]
    %v820 = vld [vmem:[%s3 + $0x80] sm:$0xff]
    %v821 = vld [vmem:[%s3 + $0x88] sm:$0xff]
    %v822 = vld [vmem:[%s3 + $0x90] sm:$0xff]
    %v823 = vld [vmem:[%s3 + $0x98] sm:$0xff]
    %v824 = vld [vmem:[%s3 + $0xa0] sm:$0xff]
    %v825 = vld [vmem:[%s3 + $0xa8] sm:$0xff]
    %v826 = vld [vmem:[%s3 + $0xb0] sm:$0xff]
    %v827 = vld [vmem:[%s3 + $0xb8] sm:$0xff]
    %v828 = vld [vmem:[%s3 + $0xc0] sm:$0xff]
    %v829 = vld [vmem:[%s3 + $0xc8] sm:$0xff]
    %v830 = vld [vmem:[%s3 + $0xd0] sm:$0xff]
    %v831 = vld [vmem:[%s3 + $0xd8] sm:$0xff]
    %v832 = vld [vmem:[%s3 + $0xe0] sm:$0xff]
    %v833 = vld [vmem:[%s3 + $0xe8] sm:$0xff]
    %v834 = vld [vmem:[%s3 + $0xf0] sm:$0xff]
    %v835 = vld [vmem:[%s3 + $0xf8] sm:$0xff]
    %836 = vmatprep.subr.mxu0 0.0
    %837 = vmatpush1.msra.mxu0 %v804
    %838 = vmatprep.subr.mxu0 0.0
    %839 = vmatpush1.msra.mxu0 %v805
    %840 = vmatprep.subr.mxu0 0.0
    %841 = vmatpush1.msra.mxu0 %v806
    %842 = vmatprep.subr.mxu0 0.0
    %843 = vmatpush1.msra.mxu0 %v807
    %844 = vmatprep.subr.mxu0 0.0
    %845 = vmatpush1.msra.mxu0 %v808
    %846 = vmatprep.subr.mxu0 0.0
    %847 = vmatpush1.msra.mxu0 %v809
    %848 = vmatprep.subr.mxu0 0.0
    %849 = vmatpush1.msra.mxu0 %v810
    %850 = vmatprep.subr.mxu0 0.0
    %851 = vmatpush1.msra.mxu0 %v811
    %852 = vmatprep.subr.mxu0 0.0
    %853 = vmatpush1.msra.mxu0 %v812
    %854 = vmatprep.subr.mxu0 0.0
    %855 = vmatpush1.msra.mxu0 %v813
    %856 = vmatprep.subr.mxu0 0.0
    %857 = vmatpush1.msra.mxu0 %v814
    %858 = vmatprep.subr.mxu0 0.0
    %859 = vmatpush1.msra.mxu0 %v815
    %860 = vmatprep.subr.mxu0 0.0
    %861 = vmatpush1.msra.mxu0 %v816
    %862 = vmatprep.subr.mxu0 0.0
    %863 = vmatpush1.msra.mxu0 %v817
    %864 = vmatprep.subr.mxu0 0.0
    %865 = vmatpush1.msra.mxu0 %v818
    %866 = vmatprep.subr.mxu0 0.0
    %867 = vmatpush1.msra.mxu0 %v819
    %868 = vmatprep.subr.mxu0 0.0
    %869 = vmatpush1.msra.mxu0 %v820
    %870 = vmatprep.subr.mxu0 0.0
    %871 = vmatpush1.msra.mxu0 %v821
    %872 = vmatprep.subr.mxu0 0.0
    %873 = vmatpush1.msra.mxu0 %v822
    %874 = vmatprep.subr.mxu0 0.0
    %875 = vmatpush1.msra.mxu0 %v823
    %876 = vmatprep.subr.mxu0 0.0
    %877 = vmatpush1.msra.mxu0 %v824
    %878 = vmatprep.subr.mxu0 0.0
    %879 = vmatpush1.msra.mxu0 %v825
    %880 = vmatprep.subr.mxu0 0.0
    %881 = vmatpush1.msra.mxu0 %v826
    %882 = vmatprep.subr.mxu0 0.0
    %883 = vmatpush1.msra.mxu0 %v827
    %884 = vmatprep.subr.mxu0 0.0
    %885 = vmatpush1.msra.mxu0 %v828
    %886 = vmatprep.subr.mxu0 0.0
    %887 = vmatpush1.msra.mxu0 %v829
    %888 = vmatprep.subr.mxu0 0.0
    %889 = vmatpush1.msra.mxu0 %v830
    %890 = vmatprep.subr.mxu0 0.0
    %891 = vmatpush1.msra.mxu0 %v831
    %892 = vmatprep.subr.mxu0 0.0
    %893 = vmatpush1.msra.mxu0 %v832
    %894 = vmatprep.subr.mxu0 0.0
    %895 = vmatpush1.msra.mxu0 %v833
    %896 = vmatprep.subr.mxu0 0.0
    %897 = vmatpush1.msra.mxu0 %v834
    %898 = vmatprep.subr.mxu0 0.0
    %899 = vmatpush1.msra.mxu0 %v835
    %900 = vmatprep.mubr.f32.mxu0 %v800
    %901 = vmatmul.mubr.f32.gmra.mrb[0].mxu0 %v796
    %v902 = vpop.f32.mrb[0].mxu0
    %v903 = vadd.f32 0.0, %v902
    %v904 = vpop.f32.mrb[0].mxu0
    %905 = vmatprep.mubr.f32.mxu0 %v801
    %906 = vmatmul.mubr.f32.gmra.mrb[0].mxu0 %v797
    %v907 = vpop.f32.mrb[0].mxu0
    %v908 = vadd.f32 0.0, %v907
    %v909 = vpop.f32.mrb[0].mxu0
    %910 = vmatprep.mubr.f32.mxu0 %v802
    %911 = vmatmul.mubr.f32.gmra.mrb[0].mxu0 %v798
    %v912 = vpop.f32.mrb[0].mxu0
    %v913 = vadd.f32 0.0, %v912
    %v914 = vpop.f32.mrb[0].mxu0
    %915 = vmatprep.mubr.f32.mxu0 %v803
    %916 = vmatmul.mubr.f32.gmra.mrb[0].mxu0 %v799
    %v917 = vpop.f32.mrb[0].mxu0
    %v918 = vadd.f32 0.0, %v917
    %v919 = vpop.f32.mrb[0].mxu0
    %920 = vdwg.mxu0
    %v921 = vadd.f32 %v36, %v903
    %v922 = vadd.f32 %v37, %v908
    %v923 = vadd.f32 %v38, %v913
    %v924 = vadd.f32 %v39, %v918
    %v925 = vadd.f32 %v921, %v435
    %v926 = vadd.f32 %v922, %v437
    %v927 = vadd.f32 %v923, %v439
    %v928 = vadd.f32 %v924, %v441
    %v929 = vld [vmem:[%s2 + $0x30] sm:$0xff]
    %v930 = vld [vmem:[%s2 + $0x28] sm:$0xff]
    %v931 = vld [vmem:[%s2 + $0x60] sm:$0xff]
    %s932 = sld [smem:[#allocation2 + $0x6]]
    %v933 = vstv %s932
    %vm934 = vcmask 261120
    %v936 = vsel %vm934, %v929, 0
    %938 = vmatprep.subr.mxu0 0.0
    %939 = vmatpush1.msra.mxu0 %v925
    %940 = vmatprep.subr.mxu0 0.0
    %941 = vmatpush1.msra.mxu0 %v926
    %942 = vmatprep.subr.mxu0 0.0
    %943 = vmatpush1.msra.mxu0 %v927
    %944 = vmatprep.subr.mxu0 0.0
    %945 = vmatpush1.msra.mxu0 %v928
    %946 = vmatprep.subr.mxu0 0.0
    %947 = vmatpush1.msra.mxu0 0.0
    %948 = vmatprep.subr.mxu0 0.0
    %949 = vmatpush1.msra.mxu0 0.0
    %950 = vmatprep.subr.mxu0 0.0
    %951 = vmatpush1.msra.mxu0 0.0
    %952 = vmatprep.subr.mxu0 0.0
    %953 = vmatpush1.msra.mxu0 0.0
    %954 = vmatprep.subr.mxu0 0.0
    %955 = vmatpush1.msra.mxu0 0.0
    %956 = vmatprep.subr.mxu0 0.0
    %957 = vmatpush1.msra.mxu0 0.0
    %958 = vmatprep.subr.mxu0 0.0
    %959 = vmatpush1.msra.mxu0 0.0
    %960 = vmatprep.subr.mxu0 0.0
    %961 = vmatpush1.msra.mxu0 0.0
    %962 = vmatprep.subr.mxu0 0.0
    %963 = vmatpush1.msra.mxu0 0.0
    %964 = vmatprep.subr.mxu0 0.0
    %965 = vmatpush1.msra.mxu0 0.0
    %966 = vmatprep.subr.mxu0 0.0
    %967 = vmatpush1.msra.mxu0 0.0
    %968 = vmatprep.subr.mxu0 0.0
    %969 = vmatpush1.msra.mxu0 0.0
    %970 = vmatprep.subr.mxu0 0.0
    %971 = vmatpush1.msra.mxu0 0.0
    %972 = vmatprep.subr.mxu0 0.0
    %973 = vmatpush1.msra.mxu0 0.0
    %974 = vmatprep.subr.mxu0 0.0
    %975 = vmatpush1.msra.mxu0 0.0
    %976 = vmatprep.subr.mxu0 0.0
    %977 = vmatpush1.msra.mxu0 0.0
    %978 = vmatprep.subr.mxu0 0.0
    %979 = vmatpush1.msra.mxu0 0.0
    %980 = vmatprep.subr.mxu0 0.0
    %981 = vmatpush1.msra.mxu0 0.0
    %982 = vmatprep.subr.mxu0 0.0
    %983 = vmatpush1.msra.mxu0 0.0
    %984 = vmatprep.subr.mxu0 0.0
    %985 = vmatpush1.msra.mxu0 0.0
    %986 = vmatprep.subr.mxu0 0.0
    %987 = vmatpush1.msra.mxu0 0.0
    %988 = vmatprep.subr.mxu0 0.0
    %989 = vmatpush1.msra.mxu0 0.0
    %990 = vmatprep.subr.mxu0 0.0
    %991 = vmatpush1.msra.mxu0 0.0
    %992 = vmatprep.subr.mxu0 0.0
    %993 = vmatpush1.msra.mxu0 0.0
    %994 = vmatprep.subr.mxu0 0.0
    %995 = vmatpush1.msra.mxu0 0.0
    %996 = vmatprep.subr.mxu0 0.0
    %997 = vmatpush1.msra.mxu0 0.0
    %998 = vmatprep.subr.mxu0 0.0
    %999 = vmatpush1.msra.mxu0 0.0
    %1000 = vmatprep.subr.mxu0 0.0
    %1001 = vmatpush1.msra.mxu0 0.0
    %1002 = vmatprep.mubr.f32.mxu0 0.0
    %1003 = vmatmul.mubr.f32.gmra.mrb[0].mxu0 %v936
    %v1004 = vpop.f32.mrb[0].mxu0
    %v1005 = vadd.f32 %v933, %v1004
    %v1006 = vpop.f32.mrb[0].mxu0
    %1007 = vdwg.mxu0
    %v1009 = vsel %vm50, %v1005, 0
    %1011 = vmatprep.subr.mxu0 0.0
    %1012 = vmatpush1.msra.mxu0 %v930
    %1013 = vmatprep.subr.mxu0 0.0
    %1014 = vmatpush1.msra.mxu0 %v931
    %1015 = vmatprep.subr.mxu0 0.0
    %1016 = vmatpush1.msra.mxu0 0.0
    %1017 = vmatprep.subr.mxu0 0.0
    %1018 = vmatpush1.msra.mxu0 0.0
    %1019 = vmatprep.subr.mxu0 0.0
    %1020 = vmatpush1.msra.mxu0 0.0
    %1021 = vmatprep.subr.mxu0 0.0
    %1022 = vmatpush1.msra.mxu0 0.0
    %1023 = vmatprep.subr.mxu0 0.0
    %1024 = vmatpush1.msra.mxu0 0.0
    %1025 = vmatprep.subr.mxu0 0.0
    %1026 = vmatpush1.msra.mxu0 0.0
    %1027 = vmatprep.subr.mxu0 0.0
    %1028 = vmatpush1.msra.mxu0 0.0
    %1029 = vmatprep.subr.mxu0 0.0
    %1030 = vmatpush1.msra.mxu0 0.0
    %1031 = vmatprep.subr.mxu0 0.0
    %1032 = vmatpush1.msra.mxu0 0.0
    %1033 = vmatprep.subr.mxu0 0.0
    %1034 = vmatpush1.msra.mxu0 0.0
    %1035 = vmatprep.subr.mxu0 0.0
    %1036 = vmatpush1.msra.mxu0 0.0
    %1037 = vmatprep.subr.mxu0 0.0
    %1038 = vmatpush1.msra.mxu0 0.0
    %1039 = vmatprep.subr.mxu0 0.0
    %1040 = vmatpush1.msra.mxu0 0.0
    %1041 = vmatprep.subr.mxu0 0.0
    %1042 = vmatpush1.msra.mxu0 0.0
    %1043 = vmatprep.subr.mxu0 0.0
    %1044 = vmatpush1.msra.mxu0 0.0
    %1045 = vmatprep.subr.mxu0 0.0
    %1046 = vmatpush1.msra.mxu0 0.0
    %1047 = vmatprep.subr.mxu0 0.0
    %1048 = vmatpush1.msra.mxu0 0.0
    %1049 = vmatprep.subr.mxu0 0.0
    %1050 = vmatpush1.msra.mxu0 0.0
    %1051 = vmatprep.subr.mxu0 0.0
    %1052 = vmatpush1.msra.mxu0 0.0
    %1053 = vmatprep.subr.mxu0 0.0
    %1054 = vmatpush1.msra.mxu0 0.0
    %1055 = vmatprep.subr.mxu0 0.0
    %1056 = vmatpush1.msra.mxu0 0.0
    %1057 = vmatprep.subr.mxu0 0.0
    %1058 = vmatpush1.msra.mxu0 0.0
    %1059 = vmatprep.subr.mxu0 0.0
    %1060 = vmatpush1.msra.mxu0 0.0
    %1061 = vmatprep.subr.mxu0 0.0
    %1062 = vmatpush1.msra.mxu0 0.0
    %1063 = vmatprep.subr.mxu0 0.0
    %1064 = vmatpush1.msra.mxu0 0.0
    %1065 = vmatprep.subr.mxu0 0.0
    %1066 = vmatpush1.msra.mxu0 0.0
    %1067 = vmatprep.subr.mxu0 0.0
    %1068 = vmatpush1.msra.mxu0 0.0
    %1069 = vmatprep.subr.mxu0 0.0
    %1070 = vmatpush1.msra.mxu0 0.0
    %1071 = vmatprep.subr.mxu0 0.0
    %1072 = vmatpush1.msra.mxu0 0.0
    %1073 = vmatprep.subr.mxu0 0.0
    %1074 = vmatpush1.msra.mxu0 0.0
    %1075 = vmatprep.mubr.f32.mxu0 0.0
    %1076 = vmatmul.mubr.f32.gmra.mrb[0].mxu0 %v1009
    %v1077 = vpop.f32.mrb[0].mxu0
    %v1078 = vadd.f32 0.0, %v1077
    %v1079 = vpop.f32.mrb[0].mxu0
    %1080 = vdwg.mxu0
    %1082 = vset.pattern.permute.xlu0 0
    %1083 = vperm.xlu0 %1082, %v1078
    %v1084 = vpop.permute.xlu0 %1083
    %vm1086 = vcmp.gt.f32.partialorder %v1084, %v1078
    %vm1087 = vcmp.eq.f32.partialorder %v1084, %v1078
    %vm1088 = vmand %vm1087, %vm489
    %vm1089 = vmor %vm1086, %vm1088
    %v1090 = vsel %vm1089, 1, 0
    %v1091 = vcvt.s32.f32 %v1090
    %v1092 = vadd.f32 %v1091, 0.0
    %1093 = vset.pattern.permute.xlu0 1
    %1094 = vperm.xlu0 %1093, %v1078
    %v1095 = vpop.permute.xlu0 %1094
    %vm1097 = vcmp.gt.f32.partialorder %v1095, %v1078
    %vm1098 = vcmp.eq.f32.partialorder %v1095, %v1078
    %vm1099 = vmand %vm1098, %vm534
    %vm1100 = vmor %vm1097, %vm1099
    %v1101 = vsel %vm1100, 1, 0
    %v1102 = vcvt.s32.f32 %v1101
    %v1103 = vadd.f32 %v1092, %v1102
    %1104 = vset.pattern.permute.xlu0 2
    %1105 = vperm.xlu0 %1104, %v1078
    %v1106 = vpop.permute.xlu0 %1105
    %vm1108 = vcmp.gt.f32.partialorder %v1106, %v1078
    %vm1109 = vcmp.eq.f32.partialorder %v1106, %v1078
    %vm1110 = vmand %vm1109, %vm579
    %vm1111 = vmor %vm1108, %vm1110
    %v1112 = vsel %vm1111, 1, 0
    %v1113 = vcvt.s32.f32 %v1112
    %v1114 = vadd.f32 %v1103, %v1113
    %1115 = vset.pattern.permute.xlu0 3
    %1116 = vperm.xlu0 %1115, %v1078
    %v1117 = vpop.permute.xlu0 %1116
    %vm1119 = vcmp.gt.f32.partialorder %v1117, %v1078
    %vm1120 = vcmp.eq.f32.partialorder %v1117, %v1078
    %vm1121 = vmand %vm1120, %vm624
    %vm1122 = vmor %vm1119, %vm1121
    %v1123 = vsel %vm1122, 1, 0
    %v1124 = vcvt.s32.f32 %v1123
    %v1125 = vadd.f32 %v1114, %v1124
    %1126 = vset.pattern.permute.xlu0 4
    %1127 = vperm.xlu0 %1126, %v1078
    %v1128 = vpop.permute.xlu0 %1127
    %vm1130 = vcmp.gt.f32.partialorder %v1128, %v1078
    %vm1131 = vcmp.eq.f32.partialorder %v1128, %v1078
    %vm1132 = vmand %vm1131, %vm669
    %vm1133 = vmor %vm1130, %vm1132
    %v1134 = vsel %vm1133, 1, 0
    %v1135 = vcvt.s32.f32 %v1134
    %v1136 = vadd.f32 %v1125, %v1135
    %1137 = vset.pattern.permute.xlu0 5
    %1138 = vperm.xlu0 %1137, %v1078
    %v1139 = vpop.permute.xlu0 %1138
    %vm1141 = vcmp.gt.f32.partialorder %v1139, %v1078
    %vm1142 = vcmp.eq.f32.partialorder %v1139, %v1078
    %vm1143 = vmand %vm1142, %vm714
    %vm1144 = vmor %vm1141, %vm1143
    %v1145 = vsel %vm1144, 1, 0
    %v1146 = vcvt.s32.f32 %v1145
    %v1147 = vadd.f32 %v1136, %v1146
    %vm1148 = vcmp.lt.f32.partialorder %v1147, 4.0
    %v1149 = vsel %vm1148, 1, 0
    %v1150 = vcvt.s32.f32 %v1149
    %vm1151 = vcmp.gt.f32.partialorder %v1150, 0.0
    %v1152 = vsel %vm1151, %v1078, -inf
    %vm1153 = vcmask 48128
    %v1154 = vsel %vm1153, %v1152, -inf
    %1155 = vmax.xlane.f32.xlu0 %v1154
    %v1156 = vpop.xlane.xlu0 %1155
    %v1157 = vsub.f32 %v1078, %v1156
    %v1158 = vmul.f32 %v1157, 1.442695
    %v1159 = vpow.pop %v1158
    %v1160 = vsel %vm1151, %v1159, 0.0
    %v1161 = vsel %vm1153, %v1160, 0.0
    %1162 = vadd.xlane.f32.xlu0 %v1161
    %v1163 = vpop.xlane.xlu0 %1162
    %v1164 = vrcp.pop %v1163
    %v1165 = vmul.f32 %v1160, %v1164
    %v1166 = vsel %vm1153, %v1165, 0.0
    %v1167 = vrot.slane %v1166, 4
    %v1168 = vadd.f32 %v1166, %v1167
    %v1169 = vrot.slane %v1168, 2
    %v1170 = vadd.f32 %v1168, %v1169
    %v1171 = vrot.slane %v1170, 1
    %v1172 = vadd.f32 %v1170, %v1171
    %vm1173 = vcmp.gt.f32.partialorder %v1165, 0.0
    %v1174 = vsel %vm1173, 1, 0
    %v1175 = vcvt.s32.f32 %v1174
    %v1176 = vsel %vm1153, %v1175, 0.0
    %v1177 = vrot.slane %v1176, 4
    %v1178 = vadd.f32 %v1176, %v1177
    %v1179 = vrot.slane %v1178, 2
    %v1180 = vadd.f32 %v1178, %v1179
    %v1181 = vrot.slane %v1180, 1
    %v1182 = vadd.f32 %v1180, %v1181
    %v1183 = vsel %vm1153, %v1172, 0.0
    %1184 = vadd.xlane.f32.xlu0 %v1183
    %v1185 = vpop.xlane.xlu0 %1184
    %v1186 = vrcp.pop 6.0
    %v1187 = vmul.f32 %v1185, %v1186
    %v1188 = vsub.f32 %v1172, %v1187
    %v1189 = vmul.f32 %v1188, %v1188
    %v1190 = vsel %vm1153, %v1189, 0.0
    %1191 = vadd.xlane.f32.xlu0 %v1190
    %v1192 = vpop.xlane.xlu0 %1191
    %v1193 = vrcp.pop 5.0
    %v1194 = vmul.f32 %v1192, %v1193
    %v1195 = vmul.f32 %v1187, %v1187
    %v1196 = vadd.f32 %v1195, 1e-10
    %v1197 = vrcp.pop %v1196
    %v1198 = vmul.f32 %v1194, %v1197
    %v1199 = vsel %vm1153, %v1182, 0.0
    %1200 = vadd.xlane.f32.xlu0 %v1199
    %v1201 = vpop.xlane.xlu0 %1200
    %v1202 = vmul.f32 %v1201, %v1186
    %v1203 = vsub.f32 %v1182, %v1202
    %v1204 = vmul.f32 %v1203, %v1203
    %v1205 = vsel %vm1153, %v1204, 0.0
    %1206 = vadd.xlane.f32.xlu0 %v1205
    %v1207 = vpop.xlane.xlu0 %1206
    %v1208 = vmul.f32 %v1207, %v1193
    %v1209 = vmul.f32 %v1202, %v1202
    %v1210 = vadd.f32 %v1209, 1e-10
    %v1211 = vrcp.pop %v1210
    %v1212 = vmul.f32 %v1208, %v1211
    %v1213 = vadd.f32 %v1198, %v1212
    %v1214 = vmul.f32 %v1213, 0.01
    %vm1215 = vcmask 0
    %1216 = vst.msk [vmem:[#allocation5] sm:$0x1] %vm1215, %v1214
    %1217 = vadd.xlane.f32.xlu0 %v1166
    %v1218 = vpop.xlane.xlu0 %1217
    %v1219 = vld [vmem:[%s1] sm:$0xff]
    %v1220 = vadd.f32 %v1218, 1.0
    %v1221 = vmul.f32 %v1219, %v1220
    %1222 = vst [vmem:[%s5] sm:$0xff] %v1221
    // Predicated region
    $region26: #{ams_forward.1} parent=1 // pred_check
      _
    $region27: #{ams_forward.1} parent=1 // pred_check_branch
      %1224 = sbr.rel (0) target = $region29
    $region28: #{ams_forward.1} parent=1 // pred_region
      _
    $region29: #{ams_forward.1} parent=1 // pred_fallthru
      _
    // Predicated region
    $region30: #{ams_forward.1} parent=1 // pred_check
      _
    $region31: #{ams_forward.1} parent=1 // pred_check_branch
      %1226 = sbr.rel (0) target = $region33
    $region32: #{ams_forward.1} parent=1 // pred_region
      %s1228 = ssub.s32 16, 16
      %1229 = vsyncadd [#allocation3], %s1228
      %s1231 = sshll.u32 [#allocation5], 4
      %s1232 = int_to_ptr.vmem [resolvable:$true] %s1231
      %1234 = dma.vmem_to_hbm [thread:$0]  %s1232, 16, %s6, [#allocation3]
    $region33: #{ams_forward.1} parent=1 // pred_fallthru
      _
    // Predicated region
    $region34: #{ams_forward.1} parent=1 // pred_check
      _
    $region35: #{ams_forward.1} parent=1 // pred_check_branch
      %1236 = sbr.rel (0) target = $region37
    $region36: #{ams_forward.1} parent=1 // pred_region
      _
    $region37: #{ams_forward.1} parent=1 // pred_fallthru
      _
    // Predicated region
    $region38: #{ams_forward.1} parent=1 // pred_check
      _
    $region39: #{ams_forward.1} parent=1 // pred_check_branch
      %1238 = sbr.rel (0) target = $region41
    $region40: #{ams_forward.1} parent=1 // pred_region
      %1239 = dma.done [#allocation3], 16
    $region41: #{ams_forward.1} parent=1 // pred_fallthru
      _
    %1240 = vsyncpa [#allocation3], 1
    %1241 = vsyncpa [#allocation4], 1

</llo_original>
